<compile_context>
chip_gen: v7x
topology: tpu7x:2x2x1
jax: 0.10.0
libtpu: 0.0.40
codegen_flags: <defaults>
</compile_context>

<pallas_src>
import math
import jax
import jax.numpy as jnp
from jax.experimental import pallas as pl
from jax.experimental.pallas import tpu as pltpu


# ------------------------------ fused kernel --------------------------------

def _ghost_fused_kernel(x_mid_ref, x_top_ref, x_bot_ref,
                        w1_ref, b1_ref, w2_ref, b2_ref, o_ref):
    """Fused GhostModule tile (one batch item, TH rows).

    x_mid_ref: (1, TH, W, Cin)  rows [t*TH, t*TH+TH) of the NHWC input
    x_top_ref: (1, 1,  W, Cin)  row  t*TH-1  (clamped; masked to zero when t == 0)
    x_bot_ref: (1, 1,  W, Cin)  row  t*TH+TH (clamped; masked on the last tile)
    w1_ref:    (Cin, Cinit)     1x1 conv weight with BN1 scale folded in
    b1_ref:    (1, Cinit)       BN1 shift
    w2_ref:    (3, 3, Cnew)     depthwise weight with BN2 scale folded in
    b2_ref:    (1, Cnew)        BN2 shift
    o_ref:     (1, TH, W, Cinit + Cnew)
    """
    t = pl.program_id(1)
    nt = pl.num_programs(1)
    _, TH, W, Cin = x_mid_ref.shape
    Cinit = w1_ref.shape[1]
    Cnew = w2_ref.shape[2]
    rep = Cnew // Cinit            # == ratio - 1

    w1 = w1_ref[...]                               # (Cin, Cinit)
    b1 = b1_ref[...].reshape(1, 1, Cinit)

    # Halo rows + main tile in x-space -> a single pointwise pass over TH+2 rows.
    x_ext = jnp.concatenate(
        [x_top_ref[0], x_mid_ref[0], x_bot_ref[0]], axis=0).astype(jnp.float32)

    if Cin * Cinit >= 128 * 128:
        # Enough work to be worth an MXU round trip (channels fill the lane dim).
        flat = x_ext.reshape((TH + 2) * W, Cin)
        acc = jnp.dot(flat, w1, preferred_element_type=jnp.float32)
        y_ext = jnp.maximum(acc.reshape(TH + 2, W, Cinit) + b1, 0.0)
    else:
        # Tiny channel counts (GhostNet regime): Cin broadcast FMAs on the VPU.
        acc = jnp.zeros((TH + 2, W, Cinit), jnp.float32)
        for ci in range(Cin):
            acc = acc + x_ext[..., ci:ci + 1] * w1[ci][None, None, :]
        y_ext = jnp.maximum(acc + b1, 0.0)                      # (TH+2, W, Cinit)

    y_mid = y_ext[1:1 + TH]                                     # (TH, W, Cinit)

    # Halo rows correspond to zero padding of x1 at the image border.
    y_top = y_ext[0:1] * (t > 0).astype(jnp.float32)
    y_bot = y_ext[TH + 1:TH + 2] * (t < nt - 1).astype(jnp.float32)
    y_dw = jnp.concatenate([y_top, y_mid, y_bot], axis=0)       # (TH+2, W, Cinit)

    # "Ghost" channel repeat: cheap-op output channel o reads x1 channel o // rep.
    src = y_dw if rep == 1 else jnp.repeat(y_dw, rep, axis=-1)  # (TH+2, W, Cnew)

    w2 = w2_ref[...]                               # (3, 3, Cnew)
    b2 = b2_ref[...].reshape(1, 1, Cnew)

    # Three width-shifted copies (dj = -1, 0, +1) via XLU roll + border mask; the
    # nine depthwise taps then only slice the leading (row) axis, which is free.
    col = jax.lax.broadcasted_iota(jnp.int32, src.shape, 1)
    shifted = []
    for dj in (-1, 0, 1):
        if dj == 0:
            shifted.append(src)
        else:
            s = pltpu.roll(src, shift=(-dj) % W, axis=1)        # out[:, w] = in[:, w+dj]
            oob = (col + dj < 0) | (col + dj >= W)
            shifted.append(jnp.where(oob, 0.0, s))

    acc2 = jnp.zeros((TH, W, Cnew), jnp.float32)
    for kh in range(3):
        for kw in range(3):
            acc2 = acc2 + shifted[kw][kh:kh + TH] * w2[kh, kw][None, None, :]
    y_cheap = jnp.maximum(acc2 + b2, 0.0)                       # (TH, W, Cnew)

    # Single lane-contiguous store of both halves (concat along the channel lanes).
    o_ref[0] = jnp.concatenate([y_mid, y_cheap], axis=-1).astype(o_ref.dtype)


# -------------------------------- wrappers -----------------------------------

def _fold_bn(gamma, beta, mean, var, eps=1e-5):
    scale = gamma / jnp.sqrt(var + eps)
    shift = beta - mean * scale
    return scale.astype(jnp.float32), shift.astype(jnp.float32)


def _pick_tile_h(H, W, Cin, Ctot):
    """Largest power-of-two row tile that divides H, gives >= 2 grid steps
    (pipelining), and keeps the double-buffered f32 in+out blocks under ~4 MiB
    per step (well below the 16/32 MiB scoped-VMEM defaults)."""
    bytes_per_row = 4 * W * (Cin + Ctot) * 2
    row_cap = max(8, (4 * 1024 * 1024) // max(bytes_per_row, 1))
    for th in (512, 256, 128, 64, 32, 16, 8):
        if th <= row_cap and H % th == 0 and H // th >= 2:
            return th
    return H


def ghost_module_forward(x_nchw, params, *, ratio=2):
    """GhostModule forward (eval-mode BN); input/output are NCHW like PyTorch."""
    # Layout glue only: NCHW -> NHWC (channels on the lane axis inside the kernel).
    x = jnp.transpose(x_nchw, (0, 2, 3, 1)).astype(jnp.float32)   # (N, H, W, Cin)
    N, H, W, Cin = x.shape

    w1 = params["w1"].astype(jnp.float32)          # (Cin, Cinit)
    Cinit = w1.shape[1]
    scale1, shift1 = _fold_bn(*params["bn1"])
    w2 = params["w2"].astype(jnp.float32)          # (3, 3, Cnew)
    Cnew = w2.shape[2]
    scale2, shift2 = _fold_bn(*params["bn2"])
    Ctot = Cinit + Cnew
    assert Cnew == Cinit * (ratio - 1)

    # Fold BN scales into the conv weights -> kernel only does FMA + shift + relu.
    w1s = w1 * scale1[None, :]
    b1 = shift1.reshape(1, Cinit)
    w2s = w2 * scale2[None, None, :]
    b2 = shift2.reshape(1, Cnew)

    TH = _pick_tile_h(H, W, Cin, Ctot)
    nt = H // TH

    out = pl.pallas_call(
        _ghost_fused_kernel,
        out_shape=jax.ShapeDtypeStruct((N, H, W, Ctot), jnp.float32),
        grid=(N, nt),
        in_specs=[
            # main row tile of the input
            pl.BlockSpec((1, TH, W, Cin), lambda n, t: (n, t, 0, 0)),
            # one-row halos above / below (clamped; masked to zero in-kernel at borders)
            pl.BlockSpec((1, 1, W, Cin),
                         lambda n, t: (n, jnp.maximum(t * TH - 1, 0), 0, 0)),
            pl.BlockSpec((1, 1, W, Cin),
                         lambda n, t: (n, jnp.minimum(t * TH + TH, H - 1), 0, 0)),
            # small parameters (constant blocks, fetched once)
            pl.BlockSpec((Cin, Cinit), lambda n, t: (0, 0)),
            pl.BlockSpec((1, Cinit), lambda n, t: (0, 0)),
            pl.BlockSpec((3, 3, Cnew), lambda n, t: (0, 0, 0)),
            pl.BlockSpec((1, Cnew), lambda n, t: (0, 0)),
        ],
        out_specs=pl.BlockSpec((1, TH, W, Ctot), lambda n, t: (n, t, 0, 0)),
        compiler_params=pltpu.CompilerParams(
            dimension_semantics=("parallel", "parallel")),
    )(x, x, x, w1s, b1, w2s, b2)

    # Channel order matches torch.cat([x1, x2], dim=1); NHWC -> NCHW.
    return jnp.transpose(out, (0, 3, 1, 2))


# --------------------------- plain-JAX reference -----------------------------

def ghost_module_reference(x_nchw, params, *, ratio=2, eps=1e-5):
    """XLA-only reference matching the PyTorch GhostModule in eval mode."""
    x = x_nchw.astype(jnp.float32)
    _, _, H, W = x.shape
    w1 = params["w1"]
    g1, be1, m1, v1 = params["bn1"]
    x1 = jnp.einsum("nchw,cd->ndhw", x, w1)
    x1 = (x1 - m1[None, :, None, None]) / jnp.sqrt(v1[None, :, None, None] + eps)
    x1 = x1 * g1[None, :, None, None] + be1[None, :, None, None]
    x1 = jnp.maximum(x1, 0.0)

    w2 = params["w2"]                                   # (3, 3, Cnew)
    g2, be2, m2, v2 = params["bn2"]
    rep = ratio - 1
    xr = x1 if rep == 1 else jnp.repeat(x1, rep, axis=1)
    xp = jnp.pad(xr, ((0, 0), (0, 0), (1, 1), (1, 1)))
    acc = jnp.zeros_like(xr)
    for kh in range(3):
        for kw in range(3):
            acc = acc + xp[:, :, kh:kh + H, kw:kw + W] * w2[kh, kw][None, :, None, None]
    x2 = (acc - m2[None, :, None, None]) / jnp.sqrt(v2[None, :, None, None] + eps)
    x2 = x2 * g2[None, :, None, None] + be2[None, :, None, None]
    x2 = jnp.maximum(x2, 0.0)
    return jnp.concatenate([x1, x2], axis=1)


def init_ghost_params(key, num_in, num_out, ratio=2, dw_size=3):
    """Deterministic parameter construction matching GhostModule.__init__ shapes."""
    init_channels = math.ceil(num_out / ratio)
    new_channels = init_channels * (ratio - 1)
    k1, k2, k3, k4, k5, k6, k7, k8 = jax.random.split(key, 8)

    # primary 1x1 conv weight: torch (init_channels, num_in, 1, 1) -> (num_in, init_channels)
    w1 = jax.random.normal(k1, (num_in, init_channels), jnp.float32) * 0.1
    bn1 = (
        1.0 + 0.1 * jax.random.normal(k2, (init_channels,), jnp.float32),     # gamma
        0.1 * jax.random.normal(k3, (init_channels,), jnp.float32),           # beta
        0.05 * jax.random.normal(k4, (init_channels,), jnp.float32),          # running_mean
        jnp.abs(jax.random.normal(k5, (init_channels,), jnp.float32)) + 0.5,  # running_var
    )

    # cheap-op depthwise weight: torch (new_channels, 1, 3, 3) -> (3, 3, new_channels)
    w2_t = jax.random.normal(k6, (new_channels, 1, dw_size, dw_size), jnp.float32) * 0.1
    w2 = jnp.transpose(w2_t[:, 0], (1, 2, 0))
    bn2 = (
        1.0 + 0.1 * jax.random.normal(k7, (new_channels,), jnp.float32),
        0.1 * jax.random.normal(k8, (new_channels,), jnp.float32),
        jnp.zeros((new_channels,), jnp.float32),
        jnp.ones((new_channels,), jnp.float32),
    )
    return {"w1": w1, "bn1": bn1, "w2": w2, "bn2": bn2}


if __name__ == "__main__":
    # GhostModule(num_in=4, num_out=8) with defaults:
    #   kernel_size=1, stride=1, ratio=2, dw_size=3, act_type='relu'
    num_in, num_out, ratio = 4, 8, 2
    key = jax.random.PRNGKey(0)
    kx, kp = jax.random.split(key)

    x = jax.random.normal(kx, (2, num_in, 16, 16), jnp.float32)   # NCHW like PyTorch
    params = init_ghost_params(kp, num_in, num_out, ratio=ratio)

    fwd = jax.jit(ghost_module_forward, static_argnames=("ratio",))
    out = fwd(x, params, ratio=ratio)
    jax.block_until_ready(out)

    assert out.shape == (2, num_out, 16, 16), out.shape

    # Numerical check against the plain-JAX reference of the PyTorch module.
    ref = ghost_module_reference(x, params, ratio=ratio)
    max_err = float(jnp.max(jnp.abs(out - ref)))
    assert max_err < 1e-3, f"max abs error vs reference: {max_err}"

    print("KERNEL_OK")
</pallas_src>

<mosaic_0001>
module attributes {stable_mosaic.version = 11 : i64} {
  func.func @_ghost_fused_kernel(%arg0: i32, %arg1: i32, %arg2: memref<1x8x16x4xf32, #tpu.memory_space<vmem>>, %arg3: memref<1x1x16x4xf32, #tpu.memory_space<vmem>>, %arg4: memref<1x1x16x4xf32, #tpu.memory_space<vmem>>, %arg5: memref<4x4xf32, #tpu.memory_space<vmem>>, %arg6: memref<1x4xf32, #tpu.memory_space<vmem>>, %arg7: memref<3x3x4xf32, #tpu.memory_space<vmem>>, %arg8: memref<1x4xf32, #tpu.memory_space<vmem>>, %arg9: memref<1x8x16x8xf32, #tpu.memory_space<vmem>>) attributes {dimension_semantics = [#tpu.dimension_semantics<parallel>, #tpu.dimension_semantics<parallel>], iteration_bounds = array<i64: 2, 2>, scalar_prefetch = 0 : i64, scratch_operands = 0 : i64, tpu.core_type = #tpu.core_type<tc>, window_params = [{transform_indices = @transform_0, window_bounds = array<i64: 1, 8, 16, 4>}, {transform_indices = @transform_1, window_bounds = array<i64: 1, 1, 16, 4>}, {transform_indices = @transform_2, window_bounds = array<i64: 1, 1, 16, 4>}, {pipeline_mode = #tpu.pipeline_mode<synchronous>, transform_indices = @transform_3, window_bounds = array<i64: 4, 4>}, {pipeline_mode = #tpu.pipeline_mode<synchronous>, transform_indices = @transform_4, window_bounds = array<i64: 1, 4>}, {pipeline_mode = #tpu.pipeline_mode<synchronous>, transform_indices = @transform_5, window_bounds = array<i64: 3, 3, 4>}, {pipeline_mode = #tpu.pipeline_mode<synchronous>, transform_indices = @transform_6, window_bounds = array<i64: 1, 4>}, {transform_indices = @transform_7, window_bounds = array<i64: 1, 8, 16, 8>}]} {
    %c0 = arith.constant 0 : index
    %c0_0 = arith.constant 0 : index
    %0 = vector.load %arg5[%c0, %c0_0] : memref<4x4xf32, #tpu.memory_space<vmem>>, vector<4x4xf32>
    %c0_1 = arith.constant 0 : index
    %c0_2 = arith.constant 0 : index
    %1 = vector.load %arg6[%c0_1, %c0_2] : memref<1x4xf32, #tpu.memory_space<vmem>>, vector<1x4xf32>
    %2 = vector.shape_cast %1 : vector<1x4xf32> to vector<1x1x4xf32>
    %c0_3 = arith.constant 0 : index
    %c0_4 = arith.constant 0 : index
    %c0_5 = arith.constant 0 : index
    %c0_6 = arith.constant 0 : index
    %3 = vector.load %arg3[%c0_3, %c0_4, %c0_5, %c0_6] : memref<1x1x16x4xf32, #tpu.memory_space<vmem>>, vector<1x1x16x4xf32>
    %4 = vector.shape_cast %3 : vector<1x1x16x4xf32> to vector<1x16x4xf32>
    %c0_7 = arith.constant 0 : index
    %c0_8 = arith.constant 0 : index
    %c0_9 = arith.constant 0 : index
    %c0_10 = arith.constant 0 : index
    %5 = vector.load %arg2[%c0_7, %c0_8, %c0_9, %c0_10] : memref<1x8x16x4xf32, #tpu.memory_space<vmem>>, vector<1x8x16x4xf32>
    %6 = vector.shape_cast %5 : vector<1x8x16x4xf32> to vector<8x16x4xf32>
    %c0_11 = arith.constant 0 : index
    %c0_12 = arith.constant 0 : index
    %c0_13 = arith.constant 0 : index
    %c0_14 = arith.constant 0 : index
    %7 = vector.load %arg4[%c0_11, %c0_12, %c0_13, %c0_14] : memref<1x1x16x4xf32, #tpu.memory_space<vmem>>, vector<1x1x16x4xf32>
    %8 = vector.shape_cast %7 : vector<1x1x16x4xf32> to vector<1x16x4xf32>
    %9 = tpu.concatenate %4, %6, %8 in 0 : vector<1x16x4xf32>, vector<8x16x4xf32>, vector<1x16x4xf32> -> vector<10x16x4xf32>
    %cst = arith.constant 0.000000e+00 : f32
    %10 = vector.broadcast %cst : f32 to vector<10x16x4xf32>
    %11 = vector.extract_strided_slice %9 {offsets = [0, 0, 0], sizes = [10, 16, 1], strides = [1, 1, 1]} : vector<10x16x4xf32> to vector<10x16x1xf32>
    %12 = vector.extract_strided_slice %0 {offsets = [0, 0], sizes = [1, 4], strides = [1, 1]} : vector<4x4xf32> to vector<1x4xf32>
    %13 = vector.shape_cast %12 : vector<1x4xf32> to vector<4xf32>
    %14 = vector.shape_cast %13 : vector<4xf32> to vector<1x1x4xf32>
    %15 = vector.broadcast %11 : vector<10x16x1xf32> to vector<10x16x4xf32>
    %16 = vector.broadcast %14 : vector<1x1x4xf32> to vector<10x16x4xf32>
    %17 = arith.mulf %15, %16 : vector<10x16x4xf32>
    %18 = arith.addf %10, %17 : vector<10x16x4xf32>
    %19 = vector.extract_strided_slice %9 {offsets = [0, 0, 1], sizes = [10, 16, 1], strides = [1, 1, 1]} : vector<10x16x4xf32> to vector<10x16x1xf32>
    %20 = vector.extract_strided_slice %0 {offsets = [1, 0], sizes = [1, 4], strides = [1, 1]} : vector<4x4xf32> to vector<1x4xf32>
    %21 = vector.shape_cast %20 : vector<1x4xf32> to vector<4xf32>
    %22 = vector.shape_cast %21 : vector<4xf32> to vector<1x1x4xf32>
    %23 = vector.broadcast %19 : vector<10x16x1xf32> to vector<10x16x4xf32>
    %24 = vector.broadcast %22 : vector<1x1x4xf32> to vector<10x16x4xf32>
    %25 = arith.mulf %23, %24 : vector<10x16x4xf32>
    %26 = arith.addf %18, %25 : vector<10x16x4xf32>
    %27 = vector.extract_strided_slice %9 {offsets = [0, 0, 2], sizes = [10, 16, 1], strides = [1, 1, 1]} : vector<10x16x4xf32> to vector<10x16x1xf32>
    %28 = vector.extract_strided_slice %0 {offsets = [2, 0], sizes = [1, 4], strides = [1, 1]} : vector<4x4xf32> to vector<1x4xf32>
    %29 = vector.shape_cast %28 : vector<1x4xf32> to vector<4xf32>
    %30 = vector.shape_cast %29 : vector<4xf32> to vector<1x1x4xf32>
    %31 = vector.broadcast %27 : vector<10x16x1xf32> to vector<10x16x4xf32>
    %32 = vector.broadcast %30 : vector<1x1x4xf32> to vector<10x16x4xf32>
    %33 = arith.mulf %31, %32 : vector<10x16x4xf32>
    %34 = arith.addf %26, %33 : vector<10x16x4xf32>
    %35 = vector.extract_strided_slice %9 {offsets = [0, 0, 3], sizes = [10, 16, 1], strides = [1, 1, 1]} : vector<10x16x4xf32> to vector<10x16x1xf32>
    %36 = vector.extract_strided_slice %0 {offsets = [3, 0], sizes = [1, 4], strides = [1, 1]} : vector<4x4xf32> to vector<1x4xf32>
    %37 = vector.shape_cast %36 : vector<1x4xf32> to vector<4xf32>
    %38 = vector.shape_cast %37 : vector<4xf32> to vector<1x1x4xf32>
    %39 = vector.broadcast %35 : vector<10x16x1xf32> to vector<10x16x4xf32>
    %40 = vector.broadcast %38 : vector<1x1x4xf32> to vector<10x16x4xf32>
    %41 = arith.mulf %39, %40 : vector<10x16x4xf32>
    %42 = arith.addf %34, %41 : vector<10x16x4xf32>
    %43 = vector.broadcast %2 : vector<1x1x4xf32> to vector<10x16x4xf32>
    %44 = arith.addf %42, %43 : vector<10x16x4xf32>
    %cst_15 = arith.constant 0.000000e+00 : f32
    %45 = vector.broadcast %cst_15 : f32 to vector<10x16x4xf32>
    %46 = arith.maximumf %44, %45 : vector<10x16x4xf32>
    %47 = vector.extract_strided_slice %46 {offsets = [1, 0, 0], sizes = [8, 16, 4], strides = [1, 1, 1]} : vector<10x16x4xf32> to vector<8x16x4xf32>
    %48 = vector.extract_strided_slice %46 {offsets = [0, 0, 0], sizes = [1, 16, 4], strides = [1, 1, 1]} : vector<10x16x4xf32> to vector<1x16x4xf32>
    %c0_i32 = arith.constant 0 : i32
    %49 = arith.cmpi sgt, %arg1, %c0_i32 : i32
    %50 = arith.extui %49 : i1 to i32
    %51 = arith.sitofp %50 : i32 to f32
    %52 = vector.broadcast %51 : f32 to vector<1x16x4xf32>
    %53 = arith.mulf %48, %52 : vector<1x16x4xf32>
    %54 = vector.extract_strided_slice %46 {offsets = [9, 0, 0], sizes = [1, 16, 4], strides = [1, 1, 1]} : vector<10x16x4xf32> to vector<1x16x4xf32>
    %c1_i32 = arith.constant 1 : i32
    %55 = arith.cmpi slt, %arg1, %c1_i32 : i32
    %56 = arith.extui %55 : i1 to i32
    %57 = arith.sitofp %56 : i32 to f32
    %58 = vector.broadcast %57 : f32 to vector<1x16x4xf32>
    %59 = arith.mulf %54, %58 : vector<1x16x4xf32>
    %60 = tpu.concatenate %53, %47, %59 in 0 : vector<1x16x4xf32>, vector<8x16x4xf32>, vector<1x16x4xf32> -> vector<10x16x4xf32>
    %c0_16 = arith.constant 0 : index
    %c0_17 = arith.constant 0 : index
    %c0_18 = arith.constant 0 : index
    %61 = vector.load %arg7[%c0_16, %c0_17, %c0_18] : memref<3x3x4xf32, #tpu.memory_space<vmem>>, vector<3x3x4xf32>
    %c0_19 = arith.constant 0 : index
    %c0_20 = arith.constant 0 : index
    %62 = vector.load %arg8[%c0_19, %c0_20] : memref<1x4xf32, #tpu.memory_space<vmem>>, vector<1x4xf32>
    %63 = vector.shape_cast %62 : vector<1x4xf32> to vector<1x1x4xf32>
    %64 = tpu.iota {dimensions = array<i32: 1>} : vector<10x16x4xi32>
    %c1_i32_21 = arith.constant 1 : i32
    %65 = tpu.dynamic_rotate %60 by %c1_i32_21 dim 1 : vector<10x16x4xf32>, i32 -> vector<10x16x4xf32>
    %c-1_i32 = arith.constant -1 : i32
    %66 = vector.broadcast %c-1_i32 : i32 to vector<10x16x4xi32>
    %67 = arith.addi %64, %66 : vector<10x16x4xi32>
    %c0_i32_22 = arith.constant 0 : i32
    %68 = vector.broadcast %c0_i32_22 : i32 to vector<10x16x4xi32>
    %69 = arith.cmpi slt, %67, %68 : vector<10x16x4xi32>
    %c-1_i32_23 = arith.constant -1 : i32
    %70 = vector.broadcast %c-1_i32_23 : i32 to vector<10x16x4xi32>
    %71 = arith.addi %64, %70 : vector<10x16x4xi32>
    %c16_i32 = arith.constant 16 : i32
    %72 = vector.broadcast %c16_i32 : i32 to vector<10x16x4xi32>
    %73 = arith.cmpi sge, %71, %72 : vector<10x16x4xi32>
    %74 = arith.ori %69, %73 : vector<10x16x4xi1>
    %cst_24 = arith.constant 0.000000e+00 : f32
    %75 = vector.broadcast %cst_24 : f32 to vector<10x16x4xf32>
    %76 = arith.select %74, %75, %65 : vector<10x16x4xi1>, vector<10x16x4xf32>
    %c15_i32 = arith.constant 15 : i32
    %77 = tpu.dynamic_rotate %60 by %c15_i32 dim 1 : vector<10x16x4xf32>, i32 -> vector<10x16x4xf32>
    %c1_i32_25 = arith.constant 1 : i32
    %78 = vector.broadcast %c1_i32_25 : i32 to vector<10x16x4xi32>
    %79 = arith.addi %64, %78 : vector<10x16x4xi32>
    %c0_i32_26 = arith.constant 0 : i32
    %80 = vector.broadcast %c0_i32_26 : i32 to vector<10x16x4xi32>
    %81 = arith.cmpi slt, %79, %80 : vector<10x16x4xi32>
    %c1_i32_27 = arith.constant 1 : i32
    %82 = vector.broadcast %c1_i32_27 : i32 to vector<10x16x4xi32>
    %83 = arith.addi %64, %82 : vector<10x16x4xi32>
    %c16_i32_28 = arith.constant 16 : i32
    %84 = vector.broadcast %c16_i32_28 : i32 to vector<10x16x4xi32>
    %85 = arith.cmpi sge, %83, %84 : vector<10x16x4xi32>
    %86 = arith.ori %81, %85 : vector<10x16x4xi1>
    %cst_29 = arith.constant 0.000000e+00 : f32
    %87 = vector.broadcast %cst_29 : f32 to vector<10x16x4xf32>
    %88 = arith.select %86, %87, %77 : vector<10x16x4xi1>, vector<10x16x4xf32>
    %cst_30 = arith.constant 0.000000e+00 : f32
    %89 = vector.broadcast %cst_30 : f32 to vector<8x16x4xf32>
    %90 = vector.extract_strided_slice %76 {offsets = [0, 0, 0], sizes = [8, 16, 4], strides = [1, 1, 1]} : vector<10x16x4xf32> to vector<8x16x4xf32>
    %91 = vector.extract_strided_slice %61 {offsets = [0, 0, 0], sizes = [1, 1, 4], strides = [1, 1, 1]} : vector<3x3x4xf32> to vector<1x1x4xf32>
    %92 = vector.shape_cast %91 : vector<1x1x4xf32> to vector<4xf32>
    %93 = vector.shape_cast %92 : vector<4xf32> to vector<1x1x4xf32>
    %94 = vector.broadcast %93 : vector<1x1x4xf32> to vector<8x16x4xf32>
    %95 = arith.mulf %90, %94 : vector<8x16x4xf32>
    %96 = arith.addf %89, %95 : vector<8x16x4xf32>
    %97 = vector.extract_strided_slice %60 {offsets = [0, 0, 0], sizes = [8, 16, 4], strides = [1, 1, 1]} : vector<10x16x4xf32> to vector<8x16x4xf32>
    %98 = vector.extract_strided_slice %61 {offsets = [0, 1, 0], sizes = [1, 1, 4], strides = [1, 1, 1]} : vector<3x3x4xf32> to vector<1x1x4xf32>
    %99 = vector.shape_cast %98 : vector<1x1x4xf32> to vector<4xf32>
    %100 = vector.shape_cast %99 : vector<4xf32> to vector<1x1x4xf32>
    %101 = vector.broadcast %100 : vector<1x1x4xf32> to vector<8x16x4xf32>
    %102 = arith.mulf %97, %101 : vector<8x16x4xf32>
    %103 = arith.addf %96, %102 : vector<8x16x4xf32>
    %104 = vector.extract_strided_slice %88 {offsets = [0, 0, 0], sizes = [8, 16, 4], strides = [1, 1, 1]} : vector<10x16x4xf32> to vector<8x16x4xf32>
    %105 = vector.extract_strided_slice %61 {offsets = [0, 2, 0], sizes = [1, 1, 4], strides = [1, 1, 1]} : vector<3x3x4xf32> to vector<1x1x4xf32>
    %106 = vector.shape_cast %105 : vector<1x1x4xf32> to vector<4xf32>
    %107 = vector.shape_cast %106 : vector<4xf32> to vector<1x1x4xf32>
    %108 = vector.broadcast %107 : vector<1x1x4xf32> to vector<8x16x4xf32>
    %109 = arith.mulf %104, %108 : vector<8x16x4xf32>
    %110 = arith.addf %103, %109 : vector<8x16x4xf32>
    %111 = vector.extract_strided_slice %76 {offsets = [1, 0, 0], sizes = [8, 16, 4], strides = [1, 1, 1]} : vector<10x16x4xf32> to vector<8x16x4xf32>
    %112 = vector.extract_strided_slice %61 {offsets = [1, 0, 0], sizes = [1, 1, 4], strides = [1, 1, 1]} : vector<3x3x4xf32> to vector<1x1x4xf32>
    %113 = vector.shape_cast %112 : vector<1x1x4xf32> to vector<4xf32>
    %114 = vector.shape_cast %113 : vector<4xf32> to vector<1x1x4xf32>
    %115 = vector.broadcast %114 : vector<1x1x4xf32> to vector<8x16x4xf32>
    %116 = arith.mulf %111, %115 : vector<8x16x4xf32>
    %117 = arith.addf %110, %116 : vector<8x16x4xf32>
    %118 = vector.extract_strided_slice %60 {offsets = [1, 0, 0], sizes = [8, 16, 4], strides = [1, 1, 1]} : vector<10x16x4xf32> to vector<8x16x4xf32>
    %119 = vector.extract_strided_slice %61 {offsets = [1, 1, 0], sizes = [1, 1, 4], strides = [1, 1, 1]} : vector<3x3x4xf32> to vector<1x1x4xf32>
    %120 = vector.shape_cast %119 : vector<1x1x4xf32> to vector<4xf32>
    %121 = vector.shape_cast %120 : vector<4xf32> to vector<1x1x4xf32>
    %122 = vector.broadcast %121 : vector<1x1x4xf32> to vector<8x16x4xf32>
    %123 = arith.mulf %118, %122 : vector<8x16x4xf32>
    %124 = arith.addf %117, %123 : vector<8x16x4xf32>
    %125 = vector.extract_strided_slice %88 {offsets = [1, 0, 0], sizes = [8, 16, 4], strides = [1, 1, 1]} : vector<10x16x4xf32> to vector<8x16x4xf32>
    %126 = vector.extract_strided_slice %61 {offsets = [1, 2, 0], sizes = [1, 1, 4], strides = [1, 1, 1]} : vector<3x3x4xf32> to vector<1x1x4xf32>
    %127 = vector.shape_cast %126 : vector<1x1x4xf32> to vector<4xf32>
    %128 = vector.shape_cast %127 : vector<4xf32> to vector<1x1x4xf32>
    %129 = vector.broadcast %128 : vector<1x1x4xf32> to vector<8x16x4xf32>
    %130 = arith.mulf %125, %129 : vector<8x16x4xf32>
    %131 = arith.addf %124, %130 : vector<8x16x4xf32>
    %132 = vector.extract_strided_slice %76 {offsets = [2, 0, 0], sizes = [8, 16, 4], strides = [1, 1, 1]} : vector<10x16x4xf32> to vector<8x16x4xf32>
    %133 = vector.extract_strided_slice %61 {offsets = [2, 0, 0], sizes = [1, 1, 4], strides = [1, 1, 1]} : vector<3x3x4xf32> to vector<1x1x4xf32>
    %134 = vector.shape_cast %133 : vector<1x1x4xf32> to vector<4xf32>
    %135 = vector.shape_cast %134 : vector<4xf32> to vector<1x1x4xf32>
    %136 = vector.broadcast %135 : vector<1x1x4xf32> to vector<8x16x4xf32>
    %137 = arith.mulf %132, %136 : vector<8x16x4xf32>
    %138 = arith.addf %131, %137 : vector<8x16x4xf32>
    %139 = vector.extract_strided_slice %60 {offsets = [2, 0, 0], sizes = [8, 16, 4], strides = [1, 1, 1]} : vector<10x16x4xf32> to vector<8x16x4xf32>
    %140 = vector.extract_strided_slice %61 {offsets = [2, 1, 0], sizes = [1, 1, 4], strides = [1, 1, 1]} : vector<3x3x4xf32> to vector<1x1x4xf32>
    %141 = vector.shape_cast %140 : vector<1x1x4xf32> to vector<4xf32>
    %142 = vector.shape_cast %141 : vector<4xf32> to vector<1x1x4xf32>
    %143 = vector.broadcast %142 : vector<1x1x4xf32> to vector<8x16x4xf32>
    %144 = arith.mulf %139, %143 : vector<8x16x4xf32>
    %145 = arith.addf %138, %144 : vector<8x16x4xf32>
    %146 = vector.extract_strided_slice %88 {offsets = [2, 0, 0], sizes = [8, 16, 4], strides = [1, 1, 1]} : vector<10x16x4xf32> to vector<8x16x4xf32>
    %147 = vector.extract_strided_slice %61 {offsets = [2, 2, 0], sizes = [1, 1, 4], strides = [1, 1, 1]} : vector<3x3x4xf32> to vector<1x1x4xf32>
    %148 = vector.shape_cast %147 : vector<1x1x4xf32> to vector<4xf32>
    %149 = vector.shape_cast %148 : vector<4xf32> to vector<1x1x4xf32>
    %150 = vector.broadcast %149 : vector<1x1x4xf32> to vector<8x16x4xf32>
    %151 = arith.mulf %146, %150 : vector<8x16x4xf32>
    %152 = arith.addf %145, %151 : vector<8x16x4xf32>
    %153 = vector.broadcast %63 : vector<1x1x4xf32> to vector<8x16x4xf32>
    %154 = arith.addf %152, %153 : vector<8x16x4xf32>
    %cst_31 = arith.constant 0.000000e+00 : f32
    %155 = vector.broadcast %cst_31 : f32 to vector<8x16x4xf32>
    %156 = arith.maximumf %154, %155 : vector<8x16x4xf32>
    %157 = tpu.concatenate %47, %156 in 2 : vector<8x16x4xf32>, vector<8x16x4xf32> -> vector<8x16x8xf32>
    %c0_32 = arith.constant 0 : index
    %c0_33 = arith.constant 0 : index
    %c0_34 = arith.constant 0 : index
    %c0_35 = arith.constant 0 : index
    %158 = vector.load %arg9[%c0_32, %c0_33, %c0_34, %c0_35] : memref<1x8x16x8xf32, #tpu.memory_space<vmem>>, vector<1x8x16x8xf32>
    %159 = vector.shape_cast %158 : vector<1x8x16x8xf32> to vector<8x16x8xf32>
    %160 = vector.shape_cast %157 : vector<8x16x8xf32> to vector<1x8x16x8xf32>
    tpu.vector_store %arg9[%c0_32, %c0_33, %c0_34, %c0_35], %160 {strides = array<i32>} : memref<1x8x16x8xf32, #tpu.memory_space<vmem>>, vector<1x8x16x8xf32>,
    return
  }
  func.func @transform_0(%arg0: i32, %arg1: i32) -> (i32, i32, i32, i32) {
    %c0_i32 = arith.constant 0 : i32
    %c0_i32_0 = arith.constant 0 : i32
    %c0_i32_1 = arith.constant 0 : i32
    return %arg0, %arg1, %c0_i32, %c0_i32_0 : i32, i32, i32, i32
  }
  func.func @transform_1(%arg0: i32, %arg1: i32) -> (i32, i32, i32, i32) {
    %c8_i32 = arith.constant 8 : i32
    %0 = arith.muli %arg1, %c8_i32 : i32
    %c1_i32 = arith.constant 1 : i32
    %1 = arith.subi %0, %c1_i32 : i32
    %c0_i32 = arith.constant 0 : i32
    %2 = arith.maxsi %1, %c0_i32 : i32
    %c0_i32_0 = arith.constant 0 : i32
    %c0_i32_1 = arith.constant 0 : i32
    %c0_i32_2 = arith.constant 0 : i32
    return %arg0, %2, %c0_i32_0, %c0_i32_1 : i32, i32, i32, i32
  }
  func.func @transform_2(%arg0: i32, %arg1: i32) -> (i32, i32, i32, i32) {
    %c8_i32 = arith.constant 8 : i32
    %0 = arith.muli %arg1, %c8_i32 : i32
    %c8_i32_0 = arith.constant 8 : i32
    %1 = arith.addi %0, %c8_i32_0 : i32
    %c15_i32 = arith.constant 15 : i32
    %2 = arith.minsi %1, %c15_i32 : i32
    %c0_i32 = arith.constant 0 : i32
    %c0_i32_1 = arith.constant 0 : i32
    %c0_i32_2 = arith.constant 0 : i32
    return %arg0, %2, %c0_i32, %c0_i32_1 : i32, i32, i32, i32
  }
  func.func @transform_3(%arg0: i32, %arg1: i32) -> (i32, i32) {
    %c0_i32 = arith.constant 0 : i32
    %c0_i32_0 = arith.constant 0 : i32
    %c0_i32_1 = arith.constant 0 : i32
    return %c0_i32, %c0_i32_0 : i32, i32
  }
  func.func @transform_4(%arg0: i32, %arg1: i32) -> (i32, i32) {
    %c0_i32 = arith.constant 0 : i32
    %c0_i32_0 = arith.constant 0 : i32
    %c0_i32_1 = arith.constant 0 : i32
    return %c0_i32, %c0_i32_0 : i32, i32
  }
  func.func @transform_5(%arg0: i32, %arg1: i32) -> (i32, i32, i32) {
    %c0_i32 = arith.constant 0 : i32
    %c0_i32_0 = arith.constant 0 : i32
    %c0_i32_1 = arith.constant 0 : i32
    %c0_i32_2 = arith.constant 0 : i32
    return %c0_i32, %c0_i32_0, %c0_i32_1 : i32, i32, i32
  }
  func.func @transform_6(%arg0: i32, %arg1: i32) -> (i32, i32) {
    %c0_i32 = arith.constant 0 : i32
    %c0_i32_0 = arith.constant 0 : i32
    %c0_i32_1 = arith.constant 0 : i32
    return %c0_i32, %c0_i32_0 : i32, i32
  }
  func.func @transform_7(%arg0: i32, %arg1: i32) -> (i32, i32, i32, i32) {
    %c0_i32 = arith.constant 0 : i32
    %c0_i32_0 = arith.constant 0 : i32
    %c0_i32_1 = arith.constant 0 : i32
    return %arg0, %arg1, %c0_i32, %c0_i32_0 : i32, i32, i32, i32
  }
}

</mosaic_0001>

<llo_original>
// kernel: ghost_module_forward.1
$region0: #{ghost_module_forward.1}
  #allocation0 [shape = 'u32[]', space=smem, size = 0x4, offset = 0x4, fixed_abs, tag = 'smem constant byte address 0x4 - core index']
  #allocation1 [shape = 'u32[144,128]{1,0:T(1,128)}', space=vmem, size = 0x12000, scoped, tag = 'internal scratch']
  %s0 = inlined_call_operand.vmem [shape: f32[2,16,16,4], index: 0, kind: input, shape index: {}, may-alias: {0,1,2}]
  %s1 = inlined_call_operand.vmem [shape: f32[2,16,16,4], index: 1, kind: input, shape index: {}, may-alias: {0,1,2}]
  %s2 = inlined_call_operand.vmem [shape: f32[2,16,16,4], index: 2, kind: input, shape index: {}, may-alias: {0,1,2}]
  %s3 = inlined_call_operand.vmem [shape: f32[4,4], index: 3, kind: input, shape index: {}]
  %s4 = inlined_call_operand.vmem [shape: f32[1,4], index: 4, kind: input, shape index: {}]
  %s5 = inlined_call_operand.vmem [shape: f32[3,3,4], index: 5, kind: input, shape index: {}]
  %s6 = inlined_call_operand.vmem [shape: f32[1,4], index: 6, kind: input, shape index: {}]
  %s7 = inlined_call_operand.vmem [shape: f32[2,16,16,8], index: 7, kind: output, shape index: {}]
  %s8 = sld [smem:[#allocation0]]
  $region61: #{ghost_module_forward.1} parent=0
    _
  %s10 = ssub.s32 1, %s8
  %s11 = scalar_select 0, %s10, %s8
  loop: start=0, step=1, limit=6
  $region2: #{ghost_module_forward.1} parent=0 // loop_pre_header
    _
  $region3: #{ghost_module_forward.1} parent=0 // loop_header
    %s13 = sphi 0, %s17
    %p14 = scmp.ge.s32.totalorder %s13, 6
    %s20 = sphi 0, %s32
    %s21 = sphi 0, %s28
    %s22 = sphi 0, %s20
    %s23 = sphi 0, %s21
    %s24 = sphi 0, %s22
    %s25 = sphi 0, %s23
    %s37 = sphi 0, %s39
    %s40 = sphi 0, %s37
    %s41 = sphi 0, %s40
    %s57 = sphi 0, %s41
    %s73 = sphi 0, %s75
    %s76 = sphi 0, %s73
    %s77 = sphi 0, %s76
    %s93 = sphi 0, %s77
    %s109 = sphi 0, %s111
    %s112 = sphi 0, %s109
    %s113 = sphi 0, %s112
    %s129 = sphi 0, %s113
    %s133 = sphi 0, %s133
    %s135 = sphi 0, %s133
    %s136 = sphi 0, %s135
    %s150 = sphi 0, %s136
    %s154 = sphi 0, %s154
    %s156 = sphi 0, %s154
    %s157 = sphi 0, %s156
    %s171 = sphi 0, %s157
    %s175 = sphi 0, %s175
    %s177 = sphi 0, %s175
    %s178 = sphi 0, %s177
    %s192 = sphi 0, %s178
    %s196 = sphi 0, %s196
    %s198 = sphi 0, %s196
    %s199 = sphi 0, %s198
    %s213 = sphi 0, %s199
    %s221 = sphi 0, %s223
    %s224 = sphi 0, %s221
    %s225 = sphi 0, %s224
    %s241 = sphi 0, %s225
  $region4: #{ghost_module_forward.1} parent=0 // loop_header_branch
    %16 = sbr.rel (%p14) target = $region8
  $region5: #{ghost_module_forward.1} parent=0 // loop_body
    %s18 = ssub.s32 %s13, 1
    %s19 = ssub.s32 %s13, 2
    %s26 = sadd.s32 1, %s21
    %p27 = scmp.ge.s32.totalorder %s26, 2
    %s28 = scalar_select %p27, 0, %s26
    %s29 = sadd.s32 1, %s20
    %s30 = scalar_select %p27, %s29, %s20
    %p31 = scmp.ge.s32.totalorder %s30, 2
    %s32 = scalar_select %p31, 0, %s30
    %s33 = ssub.s32 %s20, %s32
    %s34 = ssub.s32 %s21, %s28
    %s35 = sor.u32 %s33, %s34
    %p36 = scmp.eq.s32.totalorder %s35, 0
    %s38 = sadd.s32 %s37, 1
    %s39 = scalar_select %p36, %s37, %s38
    %p42 = pneg %p36
    %p43 = scmp.eq.s32.totalorder %s13, 3
    %p44 = por %p42, %p43
    %p45 = scmp.ne.s32.totalorder %s37, %s40
    %p46 = scmp.eq.s32.totalorder %s13, 0
    %p47 = por %p45, %p46
    %p48 = scmp.ne.s32.totalorder %s37, %s40
    %p49 = scmp.eq.s32.totalorder %s18, 3
    %p50 = por %p48, %p49
    %p51 = scmp.ne.s32.totalorder %s40, %s41
    %p52 = scmp.eq.s32.totalorder %s18, 0
    %p53 = por %p51, %p52
    %p54 = scmp.ne.s32.totalorder %s40, %s41
    %p55 = scmp.eq.s32.totalorder %s19, 3
    %p56 = por %p54, %p55
    %p58 = scmp.ne.s32.totalorder %s41, %s57
    %p59 = scmp.eq.s32.totalorder %s19, 0
    %p60 = por %p58, %p59
    %s61 = smul.u32 %s21, 8
    %s62 = ssub.s32 %s61, 1
    %p63 = scmp.gt.s32.totalorder %s62, 0
    %s64 = scalar_select %p63, %s62, 0
    %s65 = smul.u32 %s28, 8
    %s66 = ssub.s32 %s65, 1
    %p67 = scmp.gt.s32.totalorder %s66, 0
    %s68 = scalar_select %p67, %s66, 0
    %s69 = ssub.s32 %s20, %s32
    %s70 = ssub.s32 %s64, %s68
    %s71 = sor.u32 %s69, %s70
    %p72 = scmp.eq.s32.totalorder %s71, 0
    %s74 = sadd.s32 %s73, 1
    %s75 = scalar_select %p72, %s73, %s74
    %p78 = pneg %p72
    %p79 = scmp.eq.s32.totalorder %s13, 3
    %p80 = por %p78, %p79
    %p81 = scmp.ne.s32.totalorder %s73, %s76
    %p82 = scmp.eq.s32.totalorder %s13, 0
    %p83 = por %p81, %p82
    %p84 = scmp.ne.s32.totalorder %s73, %s76
    %p85 = scmp.eq.s32.totalorder %s18, 3
    %p86 = por %p84, %p85
    %p87 = scmp.ne.s32.totalorder %s76, %s77
    %p88 = scmp.eq.s32.totalorder %s18, 0
    %p89 = por %p87, %p88
    %p90 = scmp.ne.s32.totalorder %s76, %s77
    %p91 = scmp.eq.s32.totalorder %s19, 3
    %p92 = por %p90, %p91
    %p94 = scmp.ne.s32.totalorder %s77, %s93
    %p95 = scmp.eq.s32.totalorder %s19, 0
    %p96 = por %p94, %p95
    %s97 = smul.u32 %s21, 8
    %s98 = sadd.s32 %s97, 8
    %p99 = scmp.lt.s32.totalorder %s98, 15
    %s100 = scalar_select %p99, %s98, 15
    %s101 = smul.u32 %s28, 8
    %s102 = sadd.s32 %s101, 8
    %p103 = scmp.lt.s32.totalorder %s102, 15
    %s104 = scalar_select %p103, %s102, 15
    %s105 = ssub.s32 %s20, %s32
    %s106 = ssub.s32 %s100, %s104
    %s107 = sor.u32 %s105, %s106
    %p108 = scmp.eq.s32.totalorder %s107, 0
    %s110 = sadd.s32 %s109, 1
    %s111 = scalar_select %p108, %s109, %s110
    %p114 = pneg %p108
    %p115 = scmp.eq.s32.totalorder %s13, 3
    %p116 = por %p114, %p115
    %p117 = scmp.ne.s32.totalorder %s109, %s112
    %p118 = scmp.eq.s32.totalorder %s13, 0
    %p119 = por %p117, %p118
    %p120 = scmp.ne.s32.totalorder %s109, %s112
    %p121 = scmp.eq.s32.totalorder %s18, 3
    %p122 = por %p120, %p121
    %p123 = scmp.ne.s32.totalorder %s112, %s113
    %p124 = scmp.eq.s32.totalorder %s18, 0
    %p125 = por %p123, %p124
    %p126 = scmp.ne.s32.totalorder %s112, %s113
    %p127 = scmp.eq.s32.totalorder %s19, 3
    %p128 = por %p126, %p127
    %p130 = scmp.ne.s32.totalorder %s113, %s129
    %p131 = scmp.eq.s32.totalorder %s19, 0
    %p132 = por %p130, %p131
    %s134 = sadd.s32 %s133, 1
    %p137 = scmp.eq.s32.totalorder %s13, 3
    %p138 = scmp.ne.s32.totalorder %s133, %s135
    %p139 = scmp.eq.s32.totalorder %s13, 0
    %p140 = por %p138, %p139
    %p141 = scmp.ne.s32.totalorder %s133, %s135
    %p142 = scmp.eq.s32.totalorder %s18, 3
    %p143 = por %p141, %p142
    %p144 = scmp.ne.s32.totalorder %s135, %s136
    %p145 = scmp.eq.s32.totalorder %s18, 0
    %p146 = por %p144, %p145
    %p147 = scmp.ne.s32.totalorder %s135, %s136
    %p148 = scmp.eq.s32.totalorder %s19, 3
    %p149 = por %p147, %p148
    %p151 = scmp.ne.s32.totalorder %s136, %s150
    %p152 = scmp.eq.s32.totalorder %s19, 0
    %p153 = por %p151, %p152
    %s155 = sadd.s32 %s154, 1
    %p158 = scmp.eq.s32.totalorder %s13, 3
    %p159 = scmp.ne.s32.totalorder %s154, %s156
    %p160 = scmp.eq.s32.totalorder %s13, 0
    %p161 = por %p159, %p160
    %p162 = scmp.ne.s32.totalorder %s154, %s156
    %p163 = scmp.eq.s32.totalorder %s18, 3
    %p164 = por %p162, %p163
    %p165 = scmp.ne.s32.totalorder %s156, %s157
    %p166 = scmp.eq.s32.totalorder %s18, 0
    %p167 = por %p165, %p166
    %p168 = scmp.ne.s32.totalorder %s156, %s157
    %p169 = scmp.eq.s32.totalorder %s19, 3
    %p170 = por %p168, %p169
    %p172 = scmp.ne.s32.totalorder %s157, %s171
    %p173 = scmp.eq.s32.totalorder %s19, 0
    %p174 = por %p172, %p173
    %s176 = sadd.s32 %s175, 1
    %p179 = scmp.eq.s32.totalorder %s13, 3
    %p180 = scmp.ne.s32.totalorder %s175, %s177
    %p181 = scmp.eq.s32.totalorder %s13, 0
    %p182 = por %p180, %p181
    %p183 = scmp.ne.s32.totalorder %s175, %s177
    %p184 = scmp.eq.s32.totalorder %s18, 3
    %p185 = por %p183, %p184
    %p186 = scmp.ne.s32.totalorder %s177, %s178
    %p187 = scmp.eq.s32.totalorder %s18, 0
    %p188 = por %p186, %p187
    %p189 = scmp.ne.s32.totalorder %s177, %s178
    %p190 = scmp.eq.s32.totalorder %s19, 3
    %p191 = por %p189, %p190
    %p193 = scmp.ne.s32.totalorder %s178, %s192
    %p194 = scmp.eq.s32.totalorder %s19, 0
    %p195 = por %p193, %p194
    %s197 = sadd.s32 %s196, 1
    %p200 = scmp.eq.s32.totalorder %s13, 3
    %p201 = scmp.ne.s32.totalorder %s196, %s198
    %p202 = scmp.eq.s32.totalorder %s13, 0
    %p203 = por %p201, %p202
    %p204 = scmp.ne.s32.totalorder %s196, %s198
    %p205 = scmp.eq.s32.totalorder %s18, 3
    %p206 = por %p204, %p205
    %p207 = scmp.ne.s32.totalorder %s198, %s199
    %p208 = scmp.eq.s32.totalorder %s18, 0
    %p209 = por %p207, %p208
    %p210 = scmp.ne.s32.totalorder %s198, %s199
    %p211 = scmp.eq.s32.totalorder %s19, 3
    %p212 = por %p210, %p211
    %p214 = scmp.ne.s32.totalorder %s199, %s213
    %p215 = scmp.eq.s32.totalorder %s19, 0
    %p216 = por %p214, %p215
    %s217 = ssub.s32 %s20, %s32
    %s218 = ssub.s32 %s21, %s28
    %s219 = sor.u32 %s217, %s218
    %p220 = scmp.eq.s32.totalorder %s219, 0
    %s222 = sadd.s32 %s221, 1
    %s223 = scalar_select %p220, %s221, %s222
    %p226 = pneg %p220
    %p227 = scmp.eq.s32.totalorder %s13, 3
    %p228 = por %p226, %p227
    %p229 = scmp.ne.s32.totalorder %s221, %s224
    %p230 = scmp.eq.s32.totalorder %s13, 0
    %p231 = por %p229, %p230
    %p232 = scmp.ne.s32.totalorder %s221, %s224
    %p233 = scmp.eq.s32.totalorder %s18, 3
    %p234 = por %p232, %p233
    %p235 = scmp.ne.s32.totalorder %s224, %s225
    %p236 = scmp.eq.s32.totalorder %s18, 0
    %p237 = por %p235, %p236
    %p238 = scmp.ne.s32.totalorder %s224, %s225
    %p239 = scmp.eq.s32.totalorder %s19, 3
    %p240 = por %p238, %p239
    %p242 = scmp.ne.s32.totalorder %s225, %s241
    %p243 = scmp.eq.s32.totalorder %s19, 0
    %p244 = por %p242, %p243
    %p245 = scmp.le.s32.totalorder 1, %s13
    %p246 = scmp.lt.s32.totalorder %s13, 5
    %p247 = pnand %p245, %p246
    %p248 = pneg %p247
    // Predicated region
    $region9: #{ghost_module_forward.1} parent=5 // pred_check
      _
    $region10: #{ghost_module_forward.1} parent=5 // pred_check_branch
      %250 = sbr.rel (%p247) target = $region12
    $region11: #{ghost_module_forward.1} parent=5 // pred_region
      %s251 = ssub.s32 %s13, 1
      // Predicated region
      $region13: #{ghost_module_forward.1} parent=11 // pred_check
        %p252 = pneg %p146
      $region14: #{ghost_module_forward.1} parent=11 // pred_check_branch
        %254 = sbr.rel (%p252) target = $region16
      $region15: #{ghost_module_forward.1} parent=11 // pred_region
        _
      $region16: #{ghost_module_forward.1} parent=11 // pred_fallthru
        _
      // Predicated region
      $region17: #{ghost_module_forward.1} parent=11 // pred_check
        %p255 = pneg %p167
      $region18: #{ghost_module_forward.1} parent=11 // pred_check_branch
        %257 = sbr.rel (%p255) target = $region20
      $region19: #{ghost_module_forward.1} parent=11 // pred_region
        _
      $region20: #{ghost_module_forward.1} parent=11 // pred_fallthru
        _
      // Predicated region
      $region21: #{ghost_module_forward.1} parent=11 // pred_check
        %p258 = pneg %p188
      $region22: #{ghost_module_forward.1} parent=11 // pred_check_branch
        %260 = sbr.rel (%p258) target = $region24
      $region23: #{ghost_module_forward.1} parent=11 // pred_region
        _
      $region24: #{ghost_module_forward.1} parent=11 // pred_fallthru
        _
      // Predicated region
      $region25: #{ghost_module_forward.1} parent=11 // pred_check
        %p261 = pneg %p209
      $region26: #{ghost_module_forward.1} parent=11 // pred_check_branch
        %263 = sbr.rel (%p261) target = $region28
      $region27: #{ghost_module_forward.1} parent=11 // pred_region
        _
      $region28: #{ghost_module_forward.1} parent=11 // pred_fallthru
        _
    $region12: #{ghost_module_forward.1} parent=5 // pred_fallthru
      _
    %p264 = scmp.lt.s32.totalorder %s13, 4
    // Predicated region
    $region29: #{ghost_module_forward.1} parent=5 // pred_check
      %p265 = pneg %p264
    $region30: #{ghost_module_forward.1} parent=5 // pred_check_branch
      %267 = sbr.rel (%p265) target = $region32
    $region31: #{ghost_module_forward.1} parent=5 // pred_region
      // Predicated region
      $region33: #{ghost_module_forward.1} parent=31 // pred_check
        %p268 = pneg %p47
      $region34: #{ghost_module_forward.1} parent=31 // pred_check_branch
        %270 = sbr.rel (%p268) target = $region36
      $region35: #{ghost_module_forward.1} parent=31 // pred_region
        %s271 = smul.u32 8, %s21
        %p272 = scmp.lt.s32.totalorder %s20, 1
        %s273 = scalar_select %p272, %s20, 1
        %p274 = scmp.lt.s32.totalorder %s271, 15
        %s275 = scalar_select %p274, %s271, 15
        %s276 = smul.addr %s275, 2
        %s277 = smul.addr %s273, 32
        %s278 = sadd.s32 %s276, %s277
        %s279 = smul.addr %s278, 8
        %s280 = scalar_lea.vmem %s0, %s279
        %s281 = smul.u32 8, %s21
      $region36: #{ghost_module_forward.1} parent=31 // pred_fallthru
        _
      // Predicated region
      $region37: #{ghost_module_forward.1} parent=31 // pred_check
        %p282 = pneg %p83
      $region38: #{ghost_module_forward.1} parent=31 // pred_check_branch
        %284 = sbr.rel (%p282) target = $region40
      $region39: #{ghost_module_forward.1} parent=31 // pred_region
        %s285 = smul.u32 %s21, 8
        %s286 = ssub.s32 %s285, 1
        %p287 = scmp.gt.s32.totalorder %s286, 0
        %s288 = scalar_select %p287, %s286, 0
        %p289 = scmp.lt.s32.totalorder %s20, 1
        %s290 = scalar_select %p289, %s20, 1
        %p291 = scmp.lt.s32.totalorder %s288, 15
        %s292 = scalar_select %p291, %s288, 15
        %s293 = smul.addr %s292, 2
        %s294 = smul.addr %s290, 32
        %s295 = sadd.s32 %s293, %s294
        %s296 = smul.addr %s295, 8
        %s297 = scalar_lea.vmem %s1, %s296
        %s298 = smul.u32 %s21, 8
        %s299 = ssub.s32 %s298, 1
        %p300 = scmp.gt.s32.totalorder %s299, 0
        %s301 = scalar_select %p300, %s299, 0
      $region40: #{ghost_module_forward.1} parent=31 // pred_fallthru
        _
      // Predicated region
      $region41: #{ghost_module_forward.1} parent=31 // pred_check
        %p302 = pneg %p119
      $region42: #{ghost_module_forward.1} parent=31 // pred_check_branch
        %304 = sbr.rel (%p302) target = $region44
      $region43: #{ghost_module_forward.1} parent=31 // pred_region
        %s305 = smul.u32 %s21, 8
        %s306 = sadd.s32 %s305, 8
        %p307 = scmp.lt.s32.totalorder %s306, 15
        %s308 = scalar_select %p307, %s306, 15
        %p309 = scmp.lt.s32.totalorder %s20, 1
        %s310 = scalar_select %p309, %s20, 1
        %p311 = scmp.lt.s32.totalorder %s308, 15
        %s312 = scalar_select %p311, %s308, 15
        %s313 = smul.addr %s312, 2
        %s314 = smul.addr %s310, 32
        %s315 = sadd.s32 %s313, %s314
        %s316 = smul.addr %s315, 8
        %s317 = scalar_lea.vmem %s2, %s316
        %s318 = smul.u32 %s21, 8
        %s319 = sadd.s32 %s318, 8
        %p320 = scmp.lt.s32.totalorder %s319, 15
        %s321 = scalar_select %p320, %s319, 15
      $region44: #{ghost_module_forward.1} parent=31 // pred_fallthru
        _
    $region32: #{ghost_module_forward.1} parent=5 // pred_fallthru
      _
    %p322 = scmp.le.s32.totalorder 1, %s13
    %p323 = scmp.lt.s32.totalorder %s13, 5
    %p324 = pnand %p322, %p323
    %p325 = pneg %p324
    // Predicated region
    $region45: #{ghost_module_forward.1} parent=5 // pred_check
      _
    $region46: #{ghost_module_forward.1} parent=5 // pred_check_branch
      %327 = sbr.rel (%p324) target = $region48
    $region47: #{ghost_module_forward.1} parent=5 // pred_region
      %s328 = ssub.s32 %s13, 1
      %s329 = smul.u32 8, %s23
      %p330 = scmp.lt.s32.totalorder %s22, 1
      %s331 = scalar_select %p330, %s22, 1
      %p332 = scmp.lt.s32.totalorder %s329, 15
      %s333 = scalar_select %p332, %s329, 15
      %s334 = smul.addr %s333, 2
      %s335 = smul.addr %s331, 32
      %s336 = sadd.s32 %s334, %s335
      %s337 = smul.addr %s336, 8
      %s338 = scalar_lea.vmem %s0, %s337
      %p339 = pneg %p53
      %p340 = pneg %p50
      %s341 = smul.u32 %s23, 8
      %s342 = ssub.s32 %s341, 1
      %p343 = scmp.gt.s32.totalorder %s342, 0
      %s344 = scalar_select %p343, %s342, 0
      %p345 = scmp.lt.s32.totalorder %s22, 1
      %s346 = scalar_select %p345, %s22, 1
      %p347 = scmp.lt.s32.totalorder %s344, 15
      %s348 = scalar_select %p347, %s344, 15
      %s349 = smul.addr %s348, 2
      %s350 = smul.addr %s346, 32
      %s351 = sadd.s32 %s349, %s350
      %s352 = smul.addr %s351, 8
      %s353 = scalar_lea.vmem %s1, %s352
      %p354 = pneg %p89
      %p355 = pneg %p86
      %s356 = smul.u32 %s23, 8
      %s357 = sadd.s32 %s356, 8
      %p358 = scmp.lt.s32.totalorder %s357, 15
      %s359 = scalar_select %p358, %s357, 15
      %p360 = scmp.lt.s32.totalorder %s22, 1
      %s361 = scalar_select %p360, %s22, 1
      %p362 = scmp.lt.s32.totalorder %s359, 15
      %s363 = scalar_select %p362, %s359, 15
      %s364 = smul.addr %s363, 2
      %s365 = smul.addr %s361, 32
      %s366 = sadd.s32 %s364, %s365
      %s367 = smul.addr %s366, 8
      %s368 = scalar_lea.vmem %s2, %s367
      %p369 = pneg %p125
      %p370 = pneg %p122
      %p371 = pneg %p146
      %p372 = pneg %p143
      %p373 = pneg %p167
      %p374 = pneg %p164
      %p375 = pneg %p188
      %p376 = pneg %p185
      %p377 = pneg %p209
      %p378 = pneg %p206
      %p379 = pneg %p237
      %p380 = pneg %p234
      %s381 = smul.u32 8, %s23
      %p382 = scmp.lt.s32.totalorder %s22, 1
      %s383 = scalar_select %p382, %s22, 1
      %p384 = scmp.lt.s32.totalorder %s381, 15
      %s385 = scalar_select %p384, %s381, 15
      %s386 = smul.addr %s385, 2
      %s387 = smul.addr %s383, 32
      %s388 = sadd.s32 %s386, %s387
      %s389 = smul.addr %s388, 8
      %s390 = scalar_lea.vmem %s7, %s389
      %s391 = smul.u32 8, %s23
      %p392 = scmp.lt.s32.totalorder %s22, 1
      %s393 = scalar_select %p392, %s22, 1
      %p394 = scmp.lt.s32.totalorder %s391, 15
      %s395 = scalar_select %p394, %s391, 15
      %s396 = smul.addr %s395, 2
      %s397 = smul.addr %s393, 32
      %s398 = sadd.s32 %s396, %s397
      %s399 = smul.addr %s398, 8
      %s400 = scalar_lea.vmem %s0, %s399
      %s401 = smul.u32 8, %s23
      %s402 = smul.u32 %s23, 8
      %s403 = ssub.s32 %s402, 1
      %p404 = scmp.gt.s32.totalorder %s403, 0
      %s405 = scalar_select %p404, %s403, 0
      %p406 = scmp.lt.s32.totalorder %s22, 1
      %s407 = scalar_select %p406, %s22, 1
      %p408 = scmp.lt.s32.totalorder %s405, 15
      %s409 = scalar_select %p408, %s405, 15
      %s410 = smul.addr %s409, 2
      %s411 = smul.addr %s407, 32
      %s412 = sadd.s32 %s410, %s411
      %s413 = smul.addr %s412, 8
      %s414 = scalar_lea.vmem %s1, %s413
      %s415 = smul.u32 %s23, 8
      %s416 = ssub.s32 %s415, 1
      %p417 = scmp.gt.s32.totalorder %s416, 0
      %s418 = scalar_select %p417, %s416, 0
      %s419 = smul.u32 %s23, 8
      %s420 = sadd.s32 %s419, 8
      %p421 = scmp.lt.s32.totalorder %s420, 15
      %s422 = scalar_select %p421, %s420, 15
      %p423 = scmp.lt.s32.totalorder %s22, 1
      %s424 = scalar_select %p423, %s22, 1
      %p425 = scmp.lt.s32.totalorder %s422, 15
      %s426 = scalar_select %p425, %s422, 15
      %s427 = smul.addr %s426, 2
      %s428 = smul.addr %s424, 32
      %s429 = sadd.s32 %s427, %s428
      %s430 = smul.addr %s429, 8
      %s431 = scalar_lea.vmem %s2, %s430
      %s432 = smul.u32 %s23, 8
      %s433 = sadd.s32 %s432, 8
      %p434 = scmp.lt.s32.totalorder %s433, 15
      %s435 = scalar_select %p434, %s433, 15
      %s436 = smul.u32 8, %s23
      %p437 = scmp.lt.s32.totalorder %s22, 1
      %s438 = scalar_select %p437, %s22, 1
      %p439 = scmp.lt.s32.totalorder %s436, 15
      %s440 = scalar_select %p439, %s436, 15
      %s441 = smul.addr %s440, 2
      %s442 = smul.addr %s438, 32
      %s443 = sadd.s32 %s441, %s442
      %s444 = smul.addr %s443, 8
      %s445 = scalar_lea.vmem %s7, %s444
      %s446 = smul.u32 8, %s23
      %v447 = vld [vmem:[%s3] sm:$0xf]
      %v448 = vld [vmem:[%s4] sm:$0x1]
      %v449 = vld [vmem:[%s414] sm:$0xff]
      %v450 = vld [vmem:[%s414 + $0x8] sm:$0xff]
      %v451 = vld [vmem:[%s400] sm:$0xff]
      %v452 = vld [vmem:[%s400 + $0x8] sm:$0xff]
      %v453 = vld [vmem:[%s400 + $0x10] sm:$0xff]
      %v454 = vld [vmem:[%s400 + $0x18] sm:$0xff]
      %v455 = vld [vmem:[%s400 + $0x20] sm:$0xff]
      %v456 = vld [vmem:[%s400 + $0x28] sm:$0xff]
      %v457 = vld [vmem:[%s400 + $0x30] sm:$0xff]
      %v458 = vld [vmem:[%s400 + $0x38] sm:$0xff]
      %v459 = vld [vmem:[%s400 + $0x40] sm:$0xff]
      %v460 = vld [vmem:[%s400 + $0x48] sm:$0xff]
      %v461 = vld [vmem:[%s400 + $0x50] sm:$0xff]
      %v462 = vld [vmem:[%s400 + $0x58] sm:$0xff]
      %v463 = vld [vmem:[%s400 + $0x60] sm:$0xff]
      %v464 = vld [vmem:[%s400 + $0x68] sm:$0xff]
      %v465 = vld [vmem:[%s400 + $0x70] sm:$0xff]
      %v466 = vld [vmem:[%s400 + $0x78] sm:$0xff]
      %v467 = vld [vmem:[%s431] sm:$0xff]
      %v468 = vld [vmem:[%s431 + $0x8] sm:$0xff]
      %470 = vset.pattern.permute.xlu0 0
      %471 = vperm.xlu0 %470, %v449
      %v472 = vpop.permute.xlu0 %471
      %475 = vset.pattern.permute.xlu0 0
      %476 = vperm.xlu0 %475, %v450
      %v477 = vpop.permute.xlu0 %476
      %480 = vset.pattern.permute.xlu0 0
      %481 = vperm.xlu0 %480, %v451
      %v482 = vpop.permute.xlu0 %481
      %485 = vset.pattern.permute.xlu0 0
      %486 = vperm.xlu0 %485, %v452
      %v487 = vpop.permute.xlu0 %486
      %490 = vset.pattern.permute.xlu0 0
      %491 = vperm.xlu0 %490, %v453
      %v492 = vpop.permute.xlu0 %491
      %495 = vset.pattern.permute.xlu0 0
      %496 = vperm.xlu0 %495, %v454
      %v497 = vpop.permute.xlu0 %496
      %500 = vset.pattern.permute.xlu0 0
      %501 = vperm.xlu0 %500, %v455
      %v502 = vpop.permute.xlu0 %501
      %505 = vset.pattern.permute.xlu0 0
      %506 = vperm.xlu0 %505, %v456
      %v507 = vpop.permute.xlu0 %506
      %510 = vset.pattern.permute.xlu0 0
      %511 = vperm.xlu0 %510, %v457
      %v512 = vpop.permute.xlu0 %511
      %515 = vset.pattern.permute.xlu0 0
      %516 = vperm.xlu0 %515, %v458
      %v517 = vpop.permute.xlu0 %516
      %520 = vset.pattern.permute.xlu0 0
      %521 = vperm.xlu0 %520, %v459
      %v522 = vpop.permute.xlu0 %521
      %525 = vset.pattern.permute.xlu0 0
      %526 = vperm.xlu0 %525, %v460
      %v527 = vpop.permute.xlu0 %526
      %530 = vset.pattern.permute.xlu0 0
      %531 = vperm.xlu0 %530, %v461
      %v532 = vpop.permute.xlu0 %531
      %535 = vset.pattern.permute.xlu0 0
      %536 = vperm.xlu0 %535, %v462
      %v537 = vpop.permute.xlu0 %536
      %540 = vset.pattern.permute.xlu0 0
      %541 = vperm.xlu0 %540, %v463
      %v542 = vpop.permute.xlu0 %541
      %545 = vset.pattern.permute.xlu0 0
      %546 = vperm.xlu0 %545, %v464
      %v547 = vpop.permute.xlu0 %546
      %550 = vset.pattern.permute.xlu0 0
      %551 = vperm.xlu0 %550, %v465
      %v552 = vpop.permute.xlu0 %551
      %555 = vset.pattern.permute.xlu0 0
      %556 = vperm.xlu0 %555, %v466
      %v557 = vpop.permute.xlu0 %556
      %560 = vset.pattern.permute.xlu0 0
      %561 = vperm.xlu0 %560, %v467
      %v562 = vpop.permute.xlu0 %561
      %565 = vset.pattern.permute.xlu0 0
      %566 = vperm.xlu0 %565, %v468
      %v567 = vpop.permute.xlu0 %566
      %v569 = vlaneseq
      %v570 = vshrl.u32 %v569, 7
      %v571 = vsub.s32 0, %v570
      %v572 = vrot.slane %v447, %v571
      %v573 = vmul.f32 %v472, %v572
      %v574 = vmul.f32 %v477, %v572
      %v575 = vmul.f32 %v482, %v572
      %v576 = vmul.f32 %v487, %v572
      %v577 = vmul.f32 %v492, %v572
      %v578 = vmul.f32 %v497, %v572
      %v579 = vmul.f32 %v502, %v572
      %v580 = vmul.f32 %v507, %v572
      %v581 = vmul.f32 %v512, %v572
      %v582 = vmul.f32 %v517, %v572
      %v583 = vmul.f32 %v522, %v572
      %v584 = vmul.f32 %v527, %v572
      %v585 = vmul.f32 %v532, %v572
      %v586 = vmul.f32 %v537, %v572
      %v587 = vmul.f32 %v542, %v572
      %v588 = vmul.f32 %v547, %v572
      %v589 = vmul.f32 %v552, %v572
      %v590 = vmul.f32 %v557, %v572
      %v591 = vmul.f32 %v562, %v572
      %v592 = vmul.f32 %v567, %v572
      %v593 = vadd.f32 %v573, 0.0
      %v594 = vadd.f32 %v574, 0.0
      %v595 = vadd.f32 %v575, 0.0
      %v596 = vadd.f32 %v576, 0.0
      %v597 = vadd.f32 %v577, 0.0
      %v598 = vadd.f32 %v578, 0.0
      %v599 = vadd.f32 %v579, 0.0
      %v600 = vadd.f32 %v580, 0.0
      %v601 = vadd.f32 %v581, 0.0
      %v602 = vadd.f32 %v582, 0.0
      %v603 = vadd.f32 %v583, 0.0
      %v604 = vadd.f32 %v584, 0.0
      %v605 = vadd.f32 %v585, 0.0
      %v606 = vadd.f32 %v586, 0.0
      %v607 = vadd.f32 %v587, 0.0
      %v608 = vadd.f32 %v588, 0.0
      %v609 = vadd.f32 %v589, 0.0
      %v610 = vadd.f32 %v590, 0.0
      %v611 = vadd.f32 %v591, 0.0
      %v612 = vadd.f32 %v592, 0.0
      %613 = vset.pattern.permute.xlu0 1
      %614 = vperm.xlu0 %613, %v449
      %v615 = vpop.permute.xlu0 %614
      %617 = vset.pattern.permute.xlu0 1
      %618 = vperm.xlu0 %617, %v450
      %v619 = vpop.permute.xlu0 %618
      %621 = vset.pattern.permute.xlu0 1
      %622 = vperm.xlu0 %621, %v451
      %v623 = vpop.permute.xlu0 %622
      %625 = vset.pattern.permute.xlu0 1
      %626 = vperm.xlu0 %625, %v452
      %v627 = vpop.permute.xlu0 %626
      %629 = vset.pattern.permute.xlu0 1
      %630 = vperm.xlu0 %629, %v453
      %v631 = vpop.permute.xlu0 %630
      %633 = vset.pattern.permute.xlu0 1
      %634 = vperm.xlu0 %633, %v454
      %v635 = vpop.permute.xlu0 %634
      %637 = vset.pattern.permute.xlu0 1
      %638 = vperm.xlu0 %637, %v455
      %v639 = vpop.permute.xlu0 %638
      %641 = vset.pattern.permute.xlu0 1
      %642 = vperm.xlu0 %641, %v456
      %v643 = vpop.permute.xlu0 %642
      %645 = vset.pattern.permute.xlu0 1
      %646 = vperm.xlu0 %645, %v457
      %v647 = vpop.permute.xlu0 %646
      %649 = vset.pattern.permute.xlu0 1
      %650 = vperm.xlu0 %649, %v458
      %v651 = vpop.permute.xlu0 %650
      %653 = vset.pattern.permute.xlu0 1
      %654 = vperm.xlu0 %653, %v459
      %v655 = vpop.permute.xlu0 %654
      %657 = vset.pattern.permute.xlu0 1
      %658 = vperm.xlu0 %657, %v460
      %v659 = vpop.permute.xlu0 %658
      %661 = vset.pattern.permute.xlu0 1
      %662 = vperm.xlu0 %661, %v461
      %v663 = vpop.permute.xlu0 %662
      %665 = vset.pattern.permute.xlu0 1
      %666 = vperm.xlu0 %665, %v462
      %v667 = vpop.permute.xlu0 %666
      %669 = vset.pattern.permute.xlu0 1
      %670 = vperm.xlu0 %669, %v463
      %v671 = vpop.permute.xlu0 %670
      %673 = vset.pattern.permute.xlu0 1
      %674 = vperm.xlu0 %673, %v464
      %v675 = vpop.permute.xlu0 %674
      %677 = vset.pattern.permute.xlu0 1
      %678 = vperm.xlu0 %677, %v465
      %v679 = vpop.permute.xlu0 %678
      %681 = vset.pattern.permute.xlu0 1
      %682 = vperm.xlu0 %681, %v466
      %v683 = vpop.permute.xlu0 %682
      %685 = vset.pattern.permute.xlu0 1
      %686 = vperm.xlu0 %685, %v467
      %v687 = vpop.permute.xlu0 %686
      %689 = vset.pattern.permute.xlu0 1
      %690 = vperm.xlu0 %689, %v468
      %v691 = vpop.permute.xlu0 %690
      %v693 = vlaneseq
      %v694 = vshrl.u32 %v693, 7
      %v695 = vsub.s32 1, %v694
      %v696 = vrot.slane %v447, %v695
      %v697 = vmul.f32 %v615, %v696
      %v698 = vmul.f32 %v619, %v696
      %v699 = vmul.f32 %v623, %v696
      %v700 = vmul.f32 %v627, %v696
      %v701 = vmul.f32 %v631, %v696
      %v702 = vmul.f32 %v635, %v696
      %v703 = vmul.f32 %v639, %v696
      %v704 = vmul.f32 %v643, %v696
      %v705 = vmul.f32 %v647, %v696
      %v706 = vmul.f32 %v651, %v696
      %v707 = vmul.f32 %v655, %v696
      %v708 = vmul.f32 %v659, %v696
      %v709 = vmul.f32 %v663, %v696
      %v710 = vmul.f32 %v667, %v696
      %v711 = vmul.f32 %v671, %v696
      %v712 = vmul.f32 %v675, %v696
      %v713 = vmul.f32 %v679, %v696
      %v714 = vmul.f32 %v683, %v696
      %v715 = vmul.f32 %v687, %v696
      %v716 = vmul.f32 %v691, %v696
      %v717 = vadd.f32 %v593, %v697
      %v718 = vadd.f32 %v594, %v698
      %v719 = vadd.f32 %v595, %v699
      %v720 = vadd.f32 %v596, %v700
      %v721 = vadd.f32 %v597, %v701
      %v722 = vadd.f32 %v598, %v702
      %v723 = vadd.f32 %v599, %v703
      %v724 = vadd.f32 %v600, %v704
      %v725 = vadd.f32 %v601, %v705
      %v726 = vadd.f32 %v602, %v706
      %v727 = vadd.f32 %v603, %v707
      %v728 = vadd.f32 %v604, %v708
      %v729 = vadd.f32 %v605, %v709
      %v730 = vadd.f32 %v606, %v710
      %v731 = vadd.f32 %v607, %v711
      %v732 = vadd.f32 %v608, %v712
      %v733 = vadd.f32 %v609, %v713
      %v734 = vadd.f32 %v610, %v714
      %v735 = vadd.f32 %v611, %v715
      %v736 = vadd.f32 %v612, %v716
      %737 = vset.pattern.permute.xlu0 2
      %738 = vperm.xlu0 %737, %v449
      %v739 = vpop.permute.xlu0 %738
      %741 = vset.pattern.permute.xlu0 2
      %742 = vperm.xlu0 %741, %v450
      %v743 = vpop.permute.xlu0 %742
      %745 = vset.pattern.permute.xlu0 2
      %746 = vperm.xlu0 %745, %v451
      %v747 = vpop.permute.xlu0 %746
      %749 = vset.pattern.permute.xlu0 2
      %750 = vperm.xlu0 %749, %v452
      %v751 = vpop.permute.xlu0 %750
      %753 = vset.pattern.permute.xlu0 2
      %754 = vperm.xlu0 %753, %v453
      %v755 = vpop.permute.xlu0 %754
      %757 = vset.pattern.permute.xlu0 2
      %758 = vperm.xlu0 %757, %v454
      %v759 = vpop.permute.xlu0 %758
      %761 = vset.pattern.permute.xlu0 2
      %762 = vperm.xlu0 %761, %v455
      %v763 = vpop.permute.xlu0 %762
      %765 = vset.pattern.permute.xlu0 2
      %766 = vperm.xlu0 %765, %v456
      %v767 = vpop.permute.xlu0 %766
      %769 = vset.pattern.permute.xlu0 2
      %770 = vperm.xlu0 %769, %v457
      %v771 = vpop.permute.xlu0 %770
      %773 = vset.pattern.permute.xlu0 2
      %774 = vperm.xlu0 %773, %v458
      %v775 = vpop.permute.xlu0 %774
      %777 = vset.pattern.permute.xlu0 2
      %778 = vperm.xlu0 %777, %v459
      %v779 = vpop.permute.xlu0 %778
      %781 = vset.pattern.permute.xlu0 2
      %782 = vperm.xlu0 %781, %v460
      %v783 = vpop.permute.xlu0 %782
      %785 = vset.pattern.permute.xlu0 2
      %786 = vperm.xlu0 %785, %v461
      %v787 = vpop.permute.xlu0 %786
      %789 = vset.pattern.permute.xlu0 2
      %790 = vperm.xlu0 %789, %v462
      %v791 = vpop.permute.xlu0 %790
      %793 = vset.pattern.permute.xlu0 2
      %794 = vperm.xlu0 %793, %v463
      %v795 = vpop.permute.xlu0 %794
      %797 = vset.pattern.permute.xlu0 2
      %798 = vperm.xlu0 %797, %v464
      %v799 = vpop.permute.xlu0 %798
      %801 = vset.pattern.permute.xlu0 2
      %802 = vperm.xlu0 %801, %v465
      %v803 = vpop.permute.xlu0 %802
      %805 = vset.pattern.permute.xlu0 2
      %806 = vperm.xlu0 %805, %v466
      %v807 = vpop.permute.xlu0 %806
      %809 = vset.pattern.permute.xlu0 2
      %810 = vperm.xlu0 %809, %v467
      %v811 = vpop.permute.xlu0 %810
      %813 = vset.pattern.permute.xlu0 2
      %814 = vperm.xlu0 %813, %v468
      %v815 = vpop.permute.xlu0 %814
      %v817 = vlaneseq
      %v818 = vshrl.u32 %v817, 7
      %v819 = vsub.s32 2, %v818
      %v820 = vrot.slane %v447, %v819
      %v821 = vmul.f32 %v739, %v820
      %v822 = vmul.f32 %v743, %v820
      %v823 = vmul.f32 %v747, %v820
      %v824 = vmul.f32 %v751, %v820
      %v825 = vmul.f32 %v755, %v820
      %v826 = vmul.f32 %v759, %v820
      %v827 = vmul.f32 %v763, %v820
      %v828 = vmul.f32 %v767, %v820
      %v829 = vmul.f32 %v771, %v820
      %v830 = vmul.f32 %v775, %v820
      %v831 = vmul.f32 %v779, %v820
      %v832 = vmul.f32 %v783, %v820
      %v833 = vmul.f32 %v787, %v820
      %v834 = vmul.f32 %v791, %v820
      %v835 = vmul.f32 %v795, %v820
      %v836 = vmul.f32 %v799, %v820
      %v837 = vmul.f32 %v803, %v820
      %v838 = vmul.f32 %v807, %v820
      %v839 = vmul.f32 %v811, %v820
      %v840 = vmul.f32 %v815, %v820
      %v841 = vadd.f32 %v717, %v821
      %v842 = vadd.f32 %v718, %v822
      %v843 = vadd.f32 %v719, %v823
      %v844 = vadd.f32 %v720, %v824
      %v845 = vadd.f32 %v721, %v825
      %v846 = vadd.f32 %v722, %v826
      %v847 = vadd.f32 %v723, %v827
      %v848 = vadd.f32 %v724, %v828
      %v849 = vadd.f32 %v725, %v829
      %v850 = vadd.f32 %v726, %v830
      %v851 = vadd.f32 %v727, %v831
      %v852 = vadd.f32 %v728, %v832
      %v853 = vadd.f32 %v729, %v833
      %v854 = vadd.f32 %v730, %v834
      %v855 = vadd.f32 %v731, %v835
      %v856 = vadd.f32 %v732, %v836
      %v857 = vadd.f32 %v733, %v837
      %v858 = vadd.f32 %v734, %v838
      %v859 = vadd.f32 %v735, %v839
      %v860 = vadd.f32 %v736, %v840
      %861 = vset.pattern.permute.xlu0 3
      %862 = vperm.xlu0 %861, %v449
      %v863 = vpop.permute.xlu0 %862
      %865 = vset.pattern.permute.xlu0 3
      %866 = vperm.xlu0 %865, %v450
      %v867 = vpop.permute.xlu0 %866
      %869 = vset.pattern.permute.xlu0 3
      %870 = vperm.xlu0 %869, %v451
      %v871 = vpop.permute.xlu0 %870
      %873 = vset.pattern.permute.xlu0 3
      %874 = vperm.xlu0 %873, %v452
      %v875 = vpop.permute.xlu0 %874
      %877 = vset.pattern.permute.xlu0 3
      %878 = vperm.xlu0 %877, %v453
      %v879 = vpop.permute.xlu0 %878
      %881 = vset.pattern.permute.xlu0 3
      %882 = vperm.xlu0 %881, %v454
      %v883 = vpop.permute.xlu0 %882
      %885 = vset.pattern.permute.xlu0 3
      %886 = vperm.xlu0 %885, %v455
      %v887 = vpop.permute.xlu0 %886
      %889 = vset.pattern.permute.xlu0 3
      %890 = vperm.xlu0 %889, %v456
      %v891 = vpop.permute.xlu0 %890
      %893 = vset.pattern.permute.xlu0 3
      %894 = vperm.xlu0 %893, %v457
      %v895 = vpop.permute.xlu0 %894
      %897 = vset.pattern.permute.xlu0 3
      %898 = vperm.xlu0 %897, %v458
      %v899 = vpop.permute.xlu0 %898
      %901 = vset.pattern.permute.xlu0 3
      %902 = vperm.xlu0 %901, %v459
      %v903 = vpop.permute.xlu0 %902
      %905 = vset.pattern.permute.xlu0 3
      %906 = vperm.xlu0 %905, %v460
      %v907 = vpop.permute.xlu0 %906
      %909 = vset.pattern.permute.xlu0 3
      %910 = vperm.xlu0 %909, %v461
      %v911 = vpop.permute.xlu0 %910
      %913 = vset.pattern.permute.xlu0 3
      %914 = vperm.xlu0 %913, %v462
      %v915 = vpop.permute.xlu0 %914
      %917 = vset.pattern.permute.xlu0 3
      %918 = vperm.xlu0 %917, %v463
      %v919 = vpop.permute.xlu0 %918
      %921 = vset.pattern.permute.xlu0 3
      %922 = vperm.xlu0 %921, %v464
      %v923 = vpop.permute.xlu0 %922
      %925 = vset.pattern.permute.xlu0 3
      %926 = vperm.xlu0 %925, %v465
      %v927 = vpop.permute.xlu0 %926
      %929 = vset.pattern.permute.xlu0 3
      %930 = vperm.xlu0 %929, %v466
      %v931 = vpop.permute.xlu0 %930
      %933 = vset.pattern.permute.xlu0 3
      %934 = vperm.xlu0 %933, %v467
      %v935 = vpop.permute.xlu0 %934
      %937 = vset.pattern.permute.xlu0 3
      %938 = vperm.xlu0 %937, %v468
      %v939 = vpop.permute.xlu0 %938
      %v941 = vlaneseq
      %v942 = vshrl.u32 %v941, 7
      %v943 = vsub.s32 3, %v942
      %v944 = vrot.slane %v447, %v943
      %v945 = vmul.f32 %v863, %v944
      %v946 = vmul.f32 %v867, %v944
      %v947 = vmul.f32 %v871, %v944
      %v948 = vmul.f32 %v875, %v944
      %v949 = vmul.f32 %v879, %v944
      %v950 = vmul.f32 %v883, %v944
      %v951 = vmul.f32 %v887, %v944
      %v952 = vmul.f32 %v891, %v944
      %v953 = vmul.f32 %v895, %v944
      %v954 = vmul.f32 %v899, %v944
      %v955 = vmul.f32 %v903, %v944
      %v956 = vmul.f32 %v907, %v944
      %v957 = vmul.f32 %v911, %v944
      %v958 = vmul.f32 %v915, %v944
      %v959 = vmul.f32 %v919, %v944
      %v960 = vmul.f32 %v923, %v944
      %v961 = vmul.f32 %v927, %v944
      %v962 = vmul.f32 %v931, %v944
      %v963 = vmul.f32 %v935, %v944
      %v964 = vmul.f32 %v939, %v944
      %v965 = vadd.f32 %v841, %v945
      %v966 = vadd.f32 %v842, %v946
      %v967 = vadd.f32 %v843, %v947
      %v968 = vadd.f32 %v844, %v948
      %v969 = vadd.f32 %v845, %v949
      %v970 = vadd.f32 %v846, %v950
      %v971 = vadd.f32 %v847, %v951
      %v972 = vadd.f32 %v848, %v952
      %v973 = vadd.f32 %v849, %v953
      %v974 = vadd.f32 %v850, %v954
      %v975 = vadd.f32 %v851, %v955
      %v976 = vadd.f32 %v852, %v956
      %v977 = vadd.f32 %v853, %v957
      %v978 = vadd.f32 %v854, %v958
      %v979 = vadd.f32 %v855, %v959
      %v980 = vadd.f32 %v856, %v960
      %v981 = vadd.f32 %v857, %v961
      %v982 = vadd.f32 %v858, %v962
      %v983 = vadd.f32 %v859, %v963
      %v984 = vadd.f32 %v860, %v964
      %v986 = vlaneseq
      %v987 = vshrl.u32 %v986, 7
      %v988 = vsub.s32 0, %v987
      %v989 = vrot.slane %v448, %v988
      %v991 = vadd.f32 %v965, %v989
      %v992 = vadd.f32 %v966, %v989
      %v993 = vadd.f32 %v967, %v989
      %v994 = vadd.f32 %v968, %v989
      %v995 = vadd.f32 %v969, %v989
      %v996 = vadd.f32 %v970, %v989
      %v997 = vadd.f32 %v971, %v989
      %v998 = vadd.f32 %v972, %v989
      %v999 = vadd.f32 %v973, %v989
      %v1000 = vadd.f32 %v974, %v989
      %v1001 = vadd.f32 %v975, %v989
      %v1002 = vadd.f32 %v976, %v989
      %v1003 = vadd.f32 %v977, %v989
      %v1004 = vadd.f32 %v978, %v989
      %v1005 = vadd.f32 %v979, %v989
      %v1006 = vadd.f32 %v980, %v989
      %v1007 = vadd.f32 %v981, %v989
      %v1008 = vadd.f32 %v982, %v989
      %v1009 = vadd.f32 %v983, %v989
      %v1010 = vadd.f32 %v984, %v989
      %v1011 = vmax.f32 %v991, 0.0
      %v1012 = vmax.f32 %v992, 0.0
      %v1013 = vmax.f32 %v993, 0.0
      %v1014 = vmax.f32 %v994, 0.0
      %v1015 = vmax.f32 %v995, 0.0
      %v1016 = vmax.f32 %v996, 0.0
      %v1017 = vmax.f32 %v997, 0.0
      %v1018 = vmax.f32 %v998, 0.0
      %v1019 = vmax.f32 %v999, 0.0
      %v1020 = vmax.f32 %v1000, 0.0
      %v1021 = vmax.f32 %v1001, 0.0
      %v1022 = vmax.f32 %v1002, 0.0
      %v1023 = vmax.f32 %v1003, 0.0
      %v1024 = vmax.f32 %v1004, 0.0
      %v1025 = vmax.f32 %v1005, 0.0
      %v1026 = vmax.f32 %v1006, 0.0
      %v1027 = vmax.f32 %v1007, 0.0
      %v1028 = vmax.f32 %v1008, 0.0
      %v1029 = vmax.f32 %v1009, 0.0
      %v1030 = vmax.f32 %v1010, 0.0
      %p1031 = scmp.gt.s32.totalorder %s23, 0
      %s1032 = scalar_select %p1031, 1, 0
      %s1033 = scvt.s32.f32 %s1032
      %v1034 = vstv %s1033
      %v1035 = vmul.f32 %v1011, %v1034
      %v1036 = vmul.f32 %v1012, %v1034
      %p1037 = scmp.lt.s32.totalorder %s23, 1
      %s1038 = scalar_select %p1037, 1, 0
      %s1039 = scvt.s32.f32 %s1038
      %v1040 = vstv %s1039
      %v1041 = vmul.f32 %v1029, %v1040
      %v1042 = vmul.f32 %v1030, %v1040
      %v1043 = vld [vmem:[%s5] sm:$0x7]
      %v1044 = vld [vmem:[%s5 + $0x4] sm:$0x7]
      %v1045 = vld [vmem:[%s5 + $0x8] sm:$0x7]
      %v1046 = vld [vmem:[%s6] sm:$0x1]
      %v1047 = vlaneseq
      %v1048 = vshrl.u32 %v1047, 7
      %v1049 = vadd.s32 %v1048, 8
      %v1050 = vrot.slane %v1035, 7
      %v1051 = vrot.slane %v1013, 7
      %v1052 = vrot.slane %v1015, 7
      %v1053 = vrot.slane %v1017, 7
      %v1054 = vrot.slane %v1019, 7
      %v1055 = vrot.slane %v1021, 7
      %v1056 = vrot.slane %v1023, 7
      %v1057 = vrot.slane %v1025, 7
      %v1058 = vrot.slane %v1027, 7
      %v1059 = vrot.slane %v1041, 7
      %v1060 = vrot.slane %v1036, 7
      %v1061 = vrot.slane %v1014, 7
      %v1062 = vrot.slane %v1016, 7
      %v1063 = vrot.slane %v1018, 7
      %v1064 = vrot.slane %v1020, 7
      %v1065 = vrot.slane %v1022, 7
      %v1066 = vrot.slane %v1024, 7
      %v1067 = vrot.slane %v1026, 7
      %v1068 = vrot.slane %v1028, 7
      %v1069 = vrot.slane %v1042, 7
      %vm1070 = vcmp.lt.s32.totalorder %v1048, 1
      %v1071 = vsel %vm1070, %v1050, %v1060
      %v1072 = vsel %vm1070, %v1051, %v1061
      %v1073 = vsel %vm1070, %v1052, %v1062
      %v1074 = vsel %vm1070, %v1053, %v1063
      %v1075 = vsel %vm1070, %v1054, %v1064
      %v1076 = vsel %vm1070, %v1055, %v1065
      %v1077 = vsel %vm1070, %v1056, %v1066
      %v1078 = vsel %vm1070, %v1057, %v1067
      %v1079 = vsel %vm1070, %v1058, %v1068
      %v1080 = vsel %vm1070, %v1059, %v1069
      %v1081 = vsel %vm1070, %v1060, %v1050
      %v1082 = vsel %vm1070, %v1061, %v1051
      %v1083 = vsel %vm1070, %v1062, %v1052
      %v1084 = vsel %vm1070, %v1063, %v1053
      %v1085 = vsel %vm1070, %v1064, %v1054
      %v1086 = vsel %vm1070, %v1065, %v1055
      %v1087 = vsel %vm1070, %v1066, %v1056
      %v1088 = vsel %vm1070, %v1067, %v1057
      %v1089 = vsel %vm1070, %v1068, %v1058
      %v1090 = vsel %vm1070, %v1069, %v1059
      %v1091 = vadd.s32 %v1048, 4294967295
      %v1092 = vadd.s32 %v1049, 4294967295
      %vm1093 = vcmp.lt.s32.totalorder %v1091, 0
      %vm1094 = vcmp.lt.s32.totalorder %v1092, 0
      %vm1095 = vcmp.ge.s32.totalorder %v1091, 16
      %vm1096 = vcmp.ge.s32.totalorder %v1092, 16
      %vm1097 = vmor %vm1093, %vm1095
      %vm1098 = vmor %vm1094, %vm1096
      %v1099 = vsel %vm1097, 0.0, %v1081
      %v1100 = vsel %vm1098, 0.0, %v1071
      %v1101 = vsel %vm1097, 0.0, %v1082
      %v1102 = vsel %vm1098, 0.0, %v1072
      %v1103 = vsel %vm1097, 0.0, %v1083
      %v1104 = vsel %vm1098, 0.0, %v1073
      %v1105 = vsel %vm1097, 0.0, %v1084
      %v1106 = vsel %vm1098, 0.0, %v1074
      %v1107 = vsel %vm1097, 0.0, %v1085
      %v1108 = vsel %vm1098, 0.0, %v1075
      %v1109 = vsel %vm1097, 0.0, %v1086
      %v1110 = vsel %vm1098, 0.0, %v1076
      %v1111 = vsel %vm1097, 0.0, %v1087
      %v1112 = vsel %vm1098, 0.0, %v1077
      %v1113 = vsel %vm1097, 0.0, %v1088
      %v1114 = vsel %vm1098, 0.0, %v1078
      %v1115 = vsel %vm1097, 0.0, %v1089
      %v1116 = vsel %vm1098, 0.0, %v1079
      %v1117 = vsel %vm1097, 0.0, %v1090
      %v1118 = vsel %vm1098, 0.0, %v1080
      %v1119 = vrot.slane %v1035, 1
      %v1120 = vrot.slane %v1013, 1
      %v1121 = vrot.slane %v1015, 1
      %v1122 = vrot.slane %v1017, 1
      %v1123 = vrot.slane %v1019, 1
      %v1124 = vrot.slane %v1021, 1
      %v1125 = vrot.slane %v1023, 1
      %v1126 = vrot.slane %v1025, 1
      %v1127 = vrot.slane %v1027, 1
      %v1128 = vrot.slane %v1041, 1
      %v1129 = vrot.slane %v1036, 1
      %v1130 = vrot.slane %v1014, 1
      %v1131 = vrot.slane %v1016, 1
      %v1132 = vrot.slane %v1018, 1
      %v1133 = vrot.slane %v1020, 1
      %v1134 = vrot.slane %v1022, 1
      %v1135 = vrot.slane %v1024, 1
      %v1136 = vrot.slane %v1026, 1
      %v1137 = vrot.slane %v1028, 1
      %v1138 = vrot.slane %v1042, 1
      %vm1139 = vcmp.lt.s32.totalorder %v1048, 7
      %v1140 = vsel %vm1139, %v1119, %v1129
      %v1141 = vsel %vm1139, %v1120, %v1130
      %v1142 = vsel %vm1139, %v1121, %v1131
      %v1143 = vsel %vm1139, %v1122, %v1132
      %v1144 = vsel %vm1139, %v1123, %v1133
      %v1145 = vsel %vm1139, %v1124, %v1134
      %v1146 = vsel %vm1139, %v1125, %v1135
      %v1147 = vsel %vm1139, %v1126, %v1136
      %v1148 = vsel %vm1139, %v1127, %v1137
      %v1149 = vsel %vm1139, %v1128, %v1138
      %v1150 = vsel %vm1139, %v1129, %v1119
      %v1151 = vsel %vm1139, %v1130, %v1120
      %v1152 = vsel %vm1139, %v1131, %v1121
      %v1153 = vsel %vm1139, %v1132, %v1122
      %v1154 = vsel %vm1139, %v1133, %v1123
      %v1155 = vsel %vm1139, %v1134, %v1124
      %v1156 = vsel %vm1139, %v1135, %v1125
      %v1157 = vsel %vm1139, %v1136, %v1126
      %v1158 = vsel %vm1139, %v1137, %v1127
      %v1159 = vsel %vm1139, %v1138, %v1128
      %v1160 = vadd.s32 %v1048, 1
      %v1161 = vadd.s32 %v1049, 1
      %vm1162 = vcmp.lt.s32.totalorder %v1160, 0
      %vm1163 = vcmp.lt.s32.totalorder %v1161, 0
      %vm1164 = vcmp.ge.s32.totalorder %v1160, 16
      %vm1165 = vcmp.ge.s32.totalorder %v1161, 16
      %vm1166 = vmor %vm1162, %vm1164
      %vm1167 = vmor %vm1163, %vm1165
      %v1168 = vsel %vm1166, 0.0, %v1140
      %v1169 = vsel %vm1167, 0.0, %v1150
      %v1170 = vsel %vm1166, 0.0, %v1141
      %v1171 = vsel %vm1167, 0.0, %v1151
      %v1172 = vsel %vm1166, 0.0, %v1142
      %v1173 = vsel %vm1167, 0.0, %v1152
      %v1174 = vsel %vm1166, 0.0, %v1143
      %v1175 = vsel %vm1167, 0.0, %v1153
      %v1176 = vsel %vm1166, 0.0, %v1144
      %v1177 = vsel %vm1167, 0.0, %v1154
      %v1178 = vsel %vm1166, 0.0, %v1145
      %v1179 = vsel %vm1167, 0.0, %v1155
      %v1180 = vsel %vm1166, 0.0, %v1146
      %v1181 = vsel %vm1167, 0.0, %v1156
      %v1182 = vsel %vm1166, 0.0, %v1147
      %v1183 = vsel %vm1167, 0.0, %v1157
      %v1184 = vsel %vm1166, 0.0, %v1148
      %v1185 = vsel %vm1167, 0.0, %v1158
      %v1186 = vsel %vm1166, 0.0, %v1149
      %v1187 = vsel %vm1167, 0.0, %v1159
      %v1188 = vlaneseq
      %v1189 = vshrl.u32 %v1188, 7
      %v1190 = vsub.s32 0, %v1189
      %v1191 = vrot.slane %v1043, %v1190
      %v1192 = vmul.f32 %v1099, %v1191
      %v1193 = vmul.f32 %v1100, %v1191
      %v1194 = vmul.f32 %v1101, %v1191
      %v1195 = vmul.f32 %v1102, %v1191
      %v1196 = vmul.f32 %v1103, %v1191
      %v1197 = vmul.f32 %v1104, %v1191
      %v1198 = vmul.f32 %v1105, %v1191
      %v1199 = vmul.f32 %v1106, %v1191
      %v1200 = vmul.f32 %v1107, %v1191
      %v1201 = vmul.f32 %v1108, %v1191
      %v1202 = vmul.f32 %v1109, %v1191
      %v1203 = vmul.f32 %v1110, %v1191
      %v1204 = vmul.f32 %v1111, %v1191
      %v1205 = vmul.f32 %v1112, %v1191
      %v1206 = vmul.f32 %v1113, %v1191
      %v1207 = vmul.f32 %v1114, %v1191
      %v1208 = vadd.f32 %v1192, 0.0
      %v1209 = vadd.f32 %v1193, 0.0
      %v1210 = vadd.f32 %v1194, 0.0
      %v1211 = vadd.f32 %v1195, 0.0
      %v1212 = vadd.f32 %v1196, 0.0
      %v1213 = vadd.f32 %v1197, 0.0
      %v1214 = vadd.f32 %v1198, 0.0
      %v1215 = vadd.f32 %v1199, 0.0
      %v1216 = vadd.f32 %v1200, 0.0
      %v1217 = vadd.f32 %v1201, 0.0
      %v1218 = vadd.f32 %v1202, 0.0
      %v1219 = vadd.f32 %v1203, 0.0
      %v1220 = vadd.f32 %v1204, 0.0
      %v1221 = vadd.f32 %v1205, 0.0
      %v1222 = vadd.f32 %v1206, 0.0
      %v1223 = vadd.f32 %v1207, 0.0
      %v1224 = vlaneseq
      %v1225 = vshrl.u32 %v1224, 7
      %v1226 = vsub.s32 1, %v1225
      %v1227 = vrot.slane %v1043, %v1226
      %v1228 = vmul.f32 %v1035, %v1227
      %v1229 = vmul.f32 %v1036, %v1227
      %v1230 = vmul.f32 %v1013, %v1227
      %v1231 = vmul.f32 %v1014, %v1227
      %v1232 = vmul.f32 %v1015, %v1227
      %v1233 = vmul.f32 %v1016, %v1227
      %v1234 = vmul.f32 %v1017, %v1227
      %v1235 = vmul.f32 %v1018, %v1227
      %v1236 = vmul.f32 %v1019, %v1227
      %v1237 = vmul.f32 %v1020, %v1227
      %v1238 = vmul.f32 %v1021, %v1227
      %v1239 = vmul.f32 %v1022, %v1227
      %v1240 = vmul.f32 %v1023, %v1227
      %v1241 = vmul.f32 %v1024, %v1227
      %v1242 = vmul.f32 %v1025, %v1227
      %v1243 = vmul.f32 %v1026, %v1227
      %v1244 = vadd.f32 %v1208, %v1228
      %v1245 = vadd.f32 %v1209, %v1229
      %v1246 = vadd.f32 %v1210, %v1230
      %v1247 = vadd.f32 %v1211, %v1231
      %v1248 = vadd.f32 %v1212, %v1232
      %v1249 = vadd.f32 %v1213, %v1233
      %v1250 = vadd.f32 %v1214, %v1234
      %v1251 = vadd.f32 %v1215, %v1235
      %v1252 = vadd.f32 %v1216, %v1236
      %v1253 = vadd.f32 %v1217, %v1237
      %v1254 = vadd.f32 %v1218, %v1238
      %v1255 = vadd.f32 %v1219, %v1239
      %v1256 = vadd.f32 %v1220, %v1240
      %v1257 = vadd.f32 %v1221, %v1241
      %v1258 = vadd.f32 %v1222, %v1242
      %v1259 = vadd.f32 %v1223, %v1243
      %v1260 = vlaneseq
      %v1261 = vshrl.u32 %v1260, 7
      %v1262 = vsub.s32 2, %v1261
      %v1263 = vrot.slane %v1043, %v1262
      %v1264 = vmul.f32 %v1168, %v1263
      %v1265 = vmul.f32 %v1169, %v1263
      %v1266 = vmul.f32 %v1170, %v1263
      %v1267 = vmul.f32 %v1171, %v1263
      %v1268 = vmul.f32 %v1172, %v1263
      %v1269 = vmul.f32 %v1173, %v1263
      %v1270 = vmul.f32 %v1174, %v1263
      %v1271 = vmul.f32 %v1175, %v1263
      %v1272 = vmul.f32 %v1176, %v1263
      %v1273 = vmul.f32 %v1177, %v1263
      %v1274 = vmul.f32 %v1178, %v1263
      %v1275 = vmul.f32 %v1179, %v1263
      %v1276 = vmul.f32 %v1180, %v1263
      %v1277 = vmul.f32 %v1181, %v1263
      %v1278 = vmul.f32 %v1182, %v1263
      %v1279 = vmul.f32 %v1183, %v1263
      %v1280 = vadd.f32 %v1244, %v1264
      %v1281 = vadd.f32 %v1245, %v1265
      %v1282 = vadd.f32 %v1246, %v1266
      %v1283 = vadd.f32 %v1247, %v1267
      %v1284 = vadd.f32 %v1248, %v1268
      %v1285 = vadd.f32 %v1249, %v1269
      %v1286 = vadd.f32 %v1250, %v1270
      %v1287 = vadd.f32 %v1251, %v1271
      %v1288 = vadd.f32 %v1252, %v1272
      %v1289 = vadd.f32 %v1253, %v1273
      %v1290 = vadd.f32 %v1254, %v1274
      %v1291 = vadd.f32 %v1255, %v1275
      %v1292 = vadd.f32 %v1256, %v1276
      %v1293 = vadd.f32 %v1257, %v1277
      %v1294 = vadd.f32 %v1258, %v1278
      %v1295 = vadd.f32 %v1259, %v1279
      %v1296 = vlaneseq
      %v1297 = vshrl.u32 %v1296, 7
      %v1298 = vsub.s32 0, %v1297
      %v1299 = vrot.slane %v1044, %v1298
      %v1300 = vmul.f32 %v1101, %v1299
      %v1301 = vmul.f32 %v1102, %v1299
      %v1302 = vmul.f32 %v1103, %v1299
      %v1303 = vmul.f32 %v1104, %v1299
      %v1304 = vmul.f32 %v1105, %v1299
      %v1305 = vmul.f32 %v1106, %v1299
      %v1306 = vmul.f32 %v1107, %v1299
      %v1307 = vmul.f32 %v1108, %v1299
      %v1308 = vmul.f32 %v1109, %v1299
      %v1309 = vmul.f32 %v1110, %v1299
      %v1310 = vmul.f32 %v1111, %v1299
      %v1311 = vmul.f32 %v1112, %v1299
      %v1312 = vmul.f32 %v1113, %v1299
      %v1313 = vmul.f32 %v1114, %v1299
      %v1314 = vmul.f32 %v1115, %v1299
      %v1315 = vmul.f32 %v1116, %v1299
      %v1316 = vadd.f32 %v1280, %v1300
      %v1317 = vadd.f32 %v1281, %v1301
      %v1318 = vadd.f32 %v1282, %v1302
      %v1319 = vadd.f32 %v1283, %v1303
      %v1320 = vadd.f32 %v1284, %v1304
      %v1321 = vadd.f32 %v1285, %v1305
      %v1322 = vadd.f32 %v1286, %v1306
      %v1323 = vadd.f32 %v1287, %v1307
      %v1324 = vadd.f32 %v1288, %v1308
      %v1325 = vadd.f32 %v1289, %v1309
      %v1326 = vadd.f32 %v1290, %v1310
      %v1327 = vadd.f32 %v1291, %v1311
      %v1328 = vadd.f32 %v1292, %v1312
      %v1329 = vadd.f32 %v1293, %v1313
      %v1330 = vadd.f32 %v1294, %v1314
      %v1331 = vadd.f32 %v1295, %v1315
      %v1332 = vlaneseq
      %v1333 = vshrl.u32 %v1332, 7
      %v1334 = vsub.s32 1, %v1333
      %v1335 = vrot.slane %v1044, %v1334
      %v1336 = vmul.f32 %v1013, %v1335
      %v1337 = vmul.f32 %v1014, %v1335
      %v1338 = vmul.f32 %v1015, %v1335
      %v1339 = vmul.f32 %v1016, %v1335
      %v1340 = vmul.f32 %v1017, %v1335
      %v1341 = vmul.f32 %v1018, %v1335
      %v1342 = vmul.f32 %v1019, %v1335
      %v1343 = vmul.f32 %v1020, %v1335
      %v1344 = vmul.f32 %v1021, %v1335
      %v1345 = vmul.f32 %v1022, %v1335
      %v1346 = vmul.f32 %v1023, %v1335
      %v1347 = vmul.f32 %v1024, %v1335
      %v1348 = vmul.f32 %v1025, %v1335
      %v1349 = vmul.f32 %v1026, %v1335
      %v1350 = vmul.f32 %v1027, %v1335
      %v1351 = vmul.f32 %v1028, %v1335
      %v1352 = vadd.f32 %v1316, %v1336
      %v1353 = vadd.f32 %v1317, %v1337
      %v1354 = vadd.f32 %v1318, %v1338
      %v1355 = vadd.f32 %v1319, %v1339
      %v1356 = vadd.f32 %v1320, %v1340
      %v1357 = vadd.f32 %v1321, %v1341
      %v1358 = vadd.f32 %v1322, %v1342
      %v1359 = vadd.f32 %v1323, %v1343
      %v1360 = vadd.f32 %v1324, %v1344
      %v1361 = vadd.f32 %v1325, %v1345
      %v1362 = vadd.f32 %v1326, %v1346
      %v1363 = vadd.f32 %v1327, %v1347
      %v1364 = vadd.f32 %v1328, %v1348
      %v1365 = vadd.f32 %v1329, %v1349
      %v1366 = vadd.f32 %v1330, %v1350
      %v1367 = vadd.f32 %v1331, %v1351
      %v1368 = vlaneseq
      %v1369 = vshrl.u32 %v1368, 7
      %v1370 = vsub.s32 2, %v1369
      %v1371 = vrot.slane %v1044, %v1370
      %v1372 = vmul.f32 %v1170, %v1371
      %v1373 = vmul.f32 %v1171, %v1371
      %v1374 = vmul.f32 %v1172, %v1371
      %v1375 = vmul.f32 %v1173, %v1371
      %v1376 = vmul.f32 %v1174, %v1371
      %v1377 = vmul.f32 %v1175, %v1371
      %v1378 = vmul.f32 %v1176, %v1371
      %v1379 = vmul.f32 %v1177, %v1371
      %v1380 = vmul.f32 %v1178, %v1371
      %v1381 = vmul.f32 %v1179, %v1371
      %v1382 = vmul.f32 %v1180, %v1371
      %v1383 = vmul.f32 %v1181, %v1371
      %v1384 = vmul.f32 %v1182, %v1371
      %v1385 = vmul.f32 %v1183, %v1371
      %v1386 = vmul.f32 %v1184, %v1371
      %v1387 = vmul.f32 %v1185, %v1371
      %v1388 = vadd.f32 %v1352, %v1372
      %v1389 = vadd.f32 %v1353, %v1373
      %v1390 = vadd.f32 %v1354, %v1374
      %v1391 = vadd.f32 %v1355, %v1375
      %v1392 = vadd.f32 %v1356, %v1376
      %v1393 = vadd.f32 %v1357, %v1377
      %v1394 = vadd.f32 %v1358, %v1378
      %v1395 = vadd.f32 %v1359, %v1379
      %v1396 = vadd.f32 %v1360, %v1380
      %v1397 = vadd.f32 %v1361, %v1381
      %v1398 = vadd.f32 %v1362, %v1382
      %v1399 = vadd.f32 %v1363, %v1383
      %v1400 = vadd.f32 %v1364, %v1384
      %v1401 = vadd.f32 %v1365, %v1385
      %v1402 = vadd.f32 %v1366, %v1386
      %v1403 = vadd.f32 %v1367, %v1387
      %v1404 = vlaneseq
      %v1405 = vshrl.u32 %v1404, 7
      %v1406 = vsub.s32 0, %v1405
      %v1407 = vrot.slane %v1045, %v1406
      %v1408 = vmul.f32 %v1103, %v1407
      %v1409 = vmul.f32 %v1104, %v1407
      %v1410 = vmul.f32 %v1105, %v1407
      %v1411 = vmul.f32 %v1106, %v1407
      %v1412 = vmul.f32 %v1107, %v1407
      %v1413 = vmul.f32 %v1108, %v1407
      %v1414 = vmul.f32 %v1109, %v1407
      %v1415 = vmul.f32 %v1110, %v1407
      %v1416 = vmul.f32 %v1111, %v1407
      %v1417 = vmul.f32 %v1112, %v1407
      %v1418 = vmul.f32 %v1113, %v1407
      %v1419 = vmul.f32 %v1114, %v1407
      %v1420 = vmul.f32 %v1115, %v1407
      %v1421 = vmul.f32 %v1116, %v1407
      %v1422 = vmul.f32 %v1117, %v1407
      %v1423 = vmul.f32 %v1118, %v1407
      %v1424 = vadd.f32 %v1388, %v1408
      %v1425 = vadd.f32 %v1389, %v1409
      %v1426 = vadd.f32 %v1390, %v1410
      %v1427 = vadd.f32 %v1391, %v1411
      %v1428 = vadd.f32 %v1392, %v1412
      %v1429 = vadd.f32 %v1393, %v1413
      %v1430 = vadd.f32 %v1394, %v1414
      %v1431 = vadd.f32 %v1395, %v1415
      %v1432 = vadd.f32 %v1396, %v1416
      %v1433 = vadd.f32 %v1397, %v1417
      %v1434 = vadd.f32 %v1398, %v1418
      %v1435 = vadd.f32 %v1399, %v1419
      %v1436 = vadd.f32 %v1400, %v1420
      %v1437 = vadd.f32 %v1401, %v1421
      %v1438 = vadd.f32 %v1402, %v1422
      %v1439 = vadd.f32 %v1403, %v1423
      %v1440 = vlaneseq
      %v1441 = vshrl.u32 %v1440, 7
      %v1442 = vsub.s32 1, %v1441
      %v1443 = vrot.slane %v1045, %v1442
      %v1444 = vmul.f32 %v1015, %v1443
      %v1445 = vmul.f32 %v1016, %v1443
      %v1446 = vmul.f32 %v1017, %v1443
      %v1447 = vmul.f32 %v1018, %v1443
      %v1448 = vmul.f32 %v1019, %v1443
      %v1449 = vmul.f32 %v1020, %v1443
      %v1450 = vmul.f32 %v1021, %v1443
      %v1451 = vmul.f32 %v1022, %v1443
      %v1452 = vmul.f32 %v1023, %v1443
      %v1453 = vmul.f32 %v1024, %v1443
      %v1454 = vmul.f32 %v1025, %v1443
      %v1455 = vmul.f32 %v1026, %v1443
      %v1456 = vmul.f32 %v1027, %v1443
      %v1457 = vmul.f32 %v1028, %v1443
      %v1458 = vmul.f32 %v1041, %v1443
      %v1459 = vmul.f32 %v1042, %v1443
      %v1460 = vadd.f32 %v1424, %v1444
      %v1461 = vadd.f32 %v1425, %v1445
      %v1462 = vadd.f32 %v1426, %v1446
      %v1463 = vadd.f32 %v1427, %v1447
      %v1464 = vadd.f32 %v1428, %v1448
      %v1465 = vadd.f32 %v1429, %v1449
      %v1466 = vadd.f32 %v1430, %v1450
      %v1467 = vadd.f32 %v1431, %v1451
      %v1468 = vadd.f32 %v1432, %v1452
      %v1469 = vadd.f32 %v1433, %v1453
      %v1470 = vadd.f32 %v1434, %v1454
      %v1471 = vadd.f32 %v1435, %v1455
      %v1472 = vadd.f32 %v1436, %v1456
      %v1473 = vadd.f32 %v1437, %v1457
      %v1474 = vadd.f32 %v1438, %v1458
      %v1475 = vadd.f32 %v1439, %v1459
      %v1476 = vlaneseq
      %v1477 = vshrl.u32 %v1476, 7
      %v1478 = vsub.s32 2, %v1477
      %v1479 = vrot.slane %v1045, %v1478
      %v1480 = vmul.f32 %v1172, %v1479
      %v1481 = vmul.f32 %v1173, %v1479
      %v1482 = vmul.f32 %v1174, %v1479
      %v1483 = vmul.f32 %v1175, %v1479
      %v1484 = vmul.f32 %v1176, %v1479
      %v1485 = vmul.f32 %v1177, %v1479
      %v1486 = vmul.f32 %v1178, %v1479
      %v1487 = vmul.f32 %v1179, %v1479
      %v1488 = vmul.f32 %v1180, %v1479
      %v1489 = vmul.f32 %v1181, %v1479
      %v1490 = vmul.f32 %v1182, %v1479
      %v1491 = vmul.f32 %v1183, %v1479
      %v1492 = vmul.f32 %v1184, %v1479
      %v1493 = vmul.f32 %v1185, %v1479
      %v1494 = vmul.f32 %v1186, %v1479
      %v1495 = vmul.f32 %v1187, %v1479
      %v1496 = vadd.f32 %v1460, %v1480
      %v1497 = vadd.f32 %v1461, %v1481
      %v1498 = vadd.f32 %v1462, %v1482
      %v1499 = vadd.f32 %v1463, %v1483
      %v1500 = vadd.f32 %v1464, %v1484
      %v1501 = vadd.f32 %v1465, %v1485
      %v1502 = vadd.f32 %v1466, %v1486
      %v1503 = vadd.f32 %v1467, %v1487
      %v1504 = vadd.f32 %v1468, %v1488
      %v1505 = vadd.f32 %v1469, %v1489
      %v1506 = vadd.f32 %v1470, %v1490
      %v1507 = vadd.f32 %v1471, %v1491
      %v1508 = vadd.f32 %v1472, %v1492
      %v1509 = vadd.f32 %v1473, %v1493
      %v1510 = vadd.f32 %v1474, %v1494
      %v1511 = vadd.f32 %v1475, %v1495
      %v1513 = vlaneseq
      %v1514 = vshrl.u32 %v1513, 7
      %v1515 = vsub.s32 0, %v1514
      %v1516 = vrot.slane %v1046, %v1515
      %v1518 = vadd.f32 %v1496, %v1516
      %v1519 = vadd.f32 %v1497, %v1516
      %v1520 = vadd.f32 %v1498, %v1516
      %v1521 = vadd.f32 %v1499, %v1516
      %v1522 = vadd.f32 %v1500, %v1516
      %v1523 = vadd.f32 %v1501, %v1516
      %v1524 = vadd.f32 %v1502, %v1516
      %v1525 = vadd.f32 %v1503, %v1516
      %v1526 = vadd.f32 %v1504, %v1516
      %v1527 = vadd.f32 %v1505, %v1516
      %v1528 = vadd.f32 %v1506, %v1516
      %v1529 = vadd.f32 %v1507, %v1516
      %v1530 = vadd.f32 %v1508, %v1516
      %v1531 = vadd.f32 %v1509, %v1516
      %v1532 = vadd.f32 %v1510, %v1516
      %v1533 = vadd.f32 %v1511, %v1516
      %v1534 = vmax.f32 %v1518, 0.0
      %v1535 = vmax.f32 %v1519, 0.0
      %v1536 = vmax.f32 %v1520, 0.0
      %v1537 = vmax.f32 %v1521, 0.0
      %v1538 = vmax.f32 %v1522, 0.0
      %v1539 = vmax.f32 %v1523, 0.0
      %v1540 = vmax.f32 %v1524, 0.0
      %v1541 = vmax.f32 %v1525, 0.0
      %v1542 = vmax.f32 %v1526, 0.0
      %v1543 = vmax.f32 %v1527, 0.0
      %v1544 = vmax.f32 %v1528, 0.0
      %v1545 = vmax.f32 %v1529, 0.0
      %v1546 = vmax.f32 %v1530, 0.0
      %v1547 = vmax.f32 %v1531, 0.0
      %v1548 = vmax.f32 %v1532, 0.0
      %v1549 = vmax.f32 %v1533, 0.0
      %1566 = vrot.lane.b32.xlu0 %v1534, 4
      %v1567 = vpop.permute.xlu0 %1566
      %1568 = vrot.lane.b32.xlu0 %v1535, 4
      %v1569 = vpop.permute.xlu0 %1568
      %1570 = vrot.lane.b32.xlu0 %v1536, 4
      %v1571 = vpop.permute.xlu0 %1570
      %1572 = vrot.lane.b32.xlu0 %v1537, 4
      %v1573 = vpop.permute.xlu0 %1572
      %1574 = vrot.lane.b32.xlu0 %v1538, 4
      %v1575 = vpop.permute.xlu0 %1574
      %1576 = vrot.lane.b32.xlu0 %v1539, 4
      %v1577 = vpop.permute.xlu0 %1576
      %1578 = vrot.lane.b32.xlu0 %v1540, 4
      %v1579 = vpop.permute.xlu0 %1578
      %1580 = vrot.lane.b32.xlu0 %v1541, 4
      %v1581 = vpop.permute.xlu0 %1580
      %1582 = vrot.lane.b32.xlu0 %v1542, 4
      %v1583 = vpop.permute.xlu0 %1582
      %1584 = vrot.lane.b32.xlu0 %v1543, 4
      %v1585 = vpop.permute.xlu0 %1584
      %1586 = vrot.lane.b32.xlu0 %v1544, 4
      %v1587 = vpop.permute.xlu0 %1586
      %1588 = vrot.lane.b32.xlu0 %v1545, 4
      %v1589 = vpop.permute.xlu0 %1588
      %1590 = vrot.lane.b32.xlu0 %v1546, 4
      %v1591 = vpop.permute.xlu0 %1590
      %1592 = vrot.lane.b32.xlu0 %v1547, 4
      %v1593 = vpop.permute.xlu0 %1592
      %1594 = vrot.lane.b32.xlu0 %v1548, 4
      %v1595 = vpop.permute.xlu0 %1594
      %1596 = vrot.lane.b32.xlu0 %v1549, 4
      %v1597 = vpop.permute.xlu0 %1596
      %vm1614 = vcmask 31744
      %v1615 = vsel %vm1614, %v1013, %v1567
      %v1616 = vsel %vm1614, %v1014, %v1569
      %v1617 = vsel %vm1614, %v1015, %v1571
      %v1618 = vsel %vm1614, %v1016, %v1573
      %v1619 = vsel %vm1614, %v1017, %v1575
      %v1620 = vsel %vm1614, %v1018, %v1577
      %v1621 = vsel %vm1614, %v1019, %v1579
      %v1622 = vsel %vm1614, %v1020, %v1581
      %v1623 = vsel %vm1614, %v1021, %v1583
      %v1624 = vsel %vm1614, %v1022, %v1585
      %v1625 = vsel %vm1614, %v1023, %v1587
      %v1626 = vsel %vm1614, %v1024, %v1589
      %v1627 = vsel %vm1614, %v1025, %v1591
      %v1628 = vsel %vm1614, %v1026, %v1593
      %v1629 = vsel %vm1614, %v1027, %v1595
      %v1630 = vsel %vm1614, %v1028, %v1597
      %vm1631 = vcmask 64512
      %1632 = vst.msk [vmem:[%s445] sm:$0xff] %vm1631, %v1615
      %1633 = vst.msk [vmem:[%s445 + $0x8] sm:$0xff] %vm1631, %v1616
      %1634 = vst.msk [vmem:[%s445 + $0x10] sm:$0xff] %vm1631, %v1617
      %1635 = vst.msk [vmem:[%s445 + $0x18] sm:$0xff] %vm1631, %v1618
      %1636 = vst.msk [vmem:[%s445 + $0x20] sm:$0xff] %vm1631, %v1619
      %1637 = vst.msk [vmem:[%s445 + $0x28] sm:$0xff] %vm1631, %v1620
      %1638 = vst.msk [vmem:[%s445 + $0x30] sm:$0xff] %vm1631, %v1621
      %1639 = vst.msk [vmem:[%s445 + $0x38] sm:$0xff] %vm1631, %v1622
      %1640 = vst.msk [vmem:[%s445 + $0x40] sm:$0xff] %vm1631, %v1623
      %1641 = vst.msk [vmem:[%s445 + $0x48] sm:$0xff] %vm1631, %v1624
      %1642 = vst.msk [vmem:[%s445 + $0x50] sm:$0xff] %vm1631, %v1625
      %1643 = vst.msk [vmem:[%s445 + $0x58] sm:$0xff] %vm1631, %v1626
      %1644 = vst.msk [vmem:[%s445 + $0x60] sm:$0xff] %vm1631, %v1627
      %1645 = vst.msk [vmem:[%s445 + $0x68] sm:$0xff] %vm1631, %v1628
      %1646 = vst.msk [vmem:[%s445 + $0x70] sm:$0xff] %vm1631, %v1629
      %1647 = vst.msk [vmem:[%s445 + $0x78] sm:$0xff] %vm1631, %v1630
      %s1648 = smul.u32 8, %s23
      %p1649 = scmp.lt.s32.totalorder %s22, 1
      %s1650 = scalar_select %p1649, %s22, 1
      %p1651 = scmp.lt.s32.totalorder %s1648, 15
      %s1652 = scalar_select %p1651, %s1648, 15
      %s1653 = smul.addr %s1652, 2
      %s1654 = smul.addr %s1650, 32
      %s1655 = sadd.s32 %s1653, %s1654
      %s1656 = smul.addr %s1655, 8
      %s1657 = scalar_lea.vmem %s7, %s1656
      // Predicated region
      $region49: #{ghost_module_forward.1} parent=47 // pred_check
        %p1658 = pneg %p234
      $region50: #{ghost_module_forward.1} parent=47 // pred_check_branch
        %1660 = sbr.rel (%p1658) target = $region52
      $region51: #{ghost_module_forward.1} parent=47 // pred_region
        %s1661 = smul.u32 8, %s23
      $region52: #{ghost_module_forward.1} parent=47 // pred_fallthru
        _
    $region48: #{ghost_module_forward.1} parent=5 // pred_fallthru
      _
    %p1662 = scmp.le.s32.totalorder 2, %s13
    // Predicated region
    $region53: #{ghost_module_forward.1} parent=5 // pred_check
      %p1663 = pneg %p1662
    $region54: #{ghost_module_forward.1} parent=5 // pred_check_branch
      %1665 = sbr.rel (%p1663) target = $region56
    $region55: #{ghost_module_forward.1} parent=5 // pred_region
      %s1666 = ssub.s32 %s13, 2
      // Predicated region
      $region57: #{ghost_module_forward.1} parent=55 // pred_check
        %p1667 = pneg %p240
      $region58: #{ghost_module_forward.1} parent=55 // pred_check_branch
        %1669 = sbr.rel (%p1667) target = $region60
      $region59: #{ghost_module_forward.1} parent=55 // pred_region
        %s1670 = smul.u32 8, %s25
        %p1671 = scmp.lt.s32.totalorder %s24, 1
        %s1672 = scalar_select %p1671, %s24, 1
        %p1673 = scmp.lt.s32.totalorder %s1670, 15
        %s1674 = scalar_select %p1673, %s1670, 15
        %s1675 = smul.addr %s1674, 2
        %s1676 = smul.addr %s1672, 32
        %s1677 = sadd.s32 %s1675, %s1676
        %s1678 = smul.addr %s1677, 8
        %s1679 = scalar_lea.vmem %s7, %s1678
      $region60: #{ghost_module_forward.1} parent=55 // pred_fallthru
        _
    $region56: #{ghost_module_forward.1} parent=5 // pred_fallthru
      _
  $region6: #{ghost_module_forward.1} parent=0 // loop_footer
    %s17 = sadd.s32 1, %s13
  $region7: #{ghost_module_forward.1} parent=0 // loop_footer_branch
    %12 = sbr.rel target = $region3
  $region8: #{ghost_module_forward.1} parent=0 // loop_exit
    _

</llo_original>
